<compile_context>
chip_gen: v7x
topology: tpu7x:2x2x1
jax: 0.10.0
libtpu: 0.0.40
codegen_flags: <defaults>
</compile_context>

<pallas_src>
import numpy as np
import jax
import jax.numpy as jnp
from jax.experimental import pallas as pl
from jax.experimental.pallas import tpu as pltpu

tt_input_shape = [4, 7, 4, 7]     # prod = 784
tt_output_shape = [5, 5, 8, 4]    # prod = 800
tt_ranks = [1, 3, 3, 3, 1]


# ----------------------------------------------------------------------------
# Deterministic parameter construction (same math as the PyTorch __init__).
# ----------------------------------------------------------------------------
def _generate_orthogonal_tt_cores(input_shape, output_shape, ranks, seed=0):
    rng = np.random.RandomState(seed)
    input_shape = np.array(input_shape)
    output_shape = np.array(output_shape)
    ranks = np.array(ranks)
    cores_arr_len = np.sum(input_shape * output_shape * ranks[1:] * ranks[:-1])
    cores_arr = np.zeros(cores_arr_len).astype(float)
    cores_arr_idx = 0
    rv = 1
    shapes = []
    cores_indexes = []
    for k in range(input_shape.shape[0]):
        shape = [ranks[k], input_shape[k], output_shape[k], ranks[k + 1]]
        shapes.append((input_shape[k] * ranks[k + 1], ranks[k] * output_shape[k]))
        tall_shape = (np.prod(shape[:3]), shape[3])
        curr_core = np.dot(rv, rng.normal(0, 1, (shape[0], np.prod(shape[1:]))))
        curr_core = curr_core.reshape(tall_shape)
        if k < input_shape.shape[0] - 1:
            curr_core, rv = np.linalg.qr(curr_core)
        cores_arr[cores_arr_idx:cores_arr_idx + curr_core.size] = curr_core.flatten()
        cores_indexes.append((cores_arr_idx, cores_arr_idx + curr_core.size))
        cores_arr_idx += curr_core.size
    glarot_style = (np.prod(input_shape) * np.prod(ranks)) ** (1.0 / input_shape.shape[0])
    cores_arr = 0.1 / glarot_style * cores_arr
    return cores_arr, shapes, cores_indexes


# ----------------------------------------------------------------------------
# Exact float64 evaluation of the PyTorch forward's reshape/bmm chain.
# Used both to build the contracted dense weight and as the test reference.
# ----------------------------------------------------------------------------
def _chain_forward_np(cores, out_shape, bias, x):
    x = np.asarray(x, dtype=np.float64)
    B = x.shape[0]
    for i, w in enumerate(cores):
        K, _ = w.shape
        x = x.reshape(B, -1, K)                                # x.view(B, -1, shape[0])
        x = np.einsum("bmk,kn->bmn", x, np.asarray(w, dtype=np.float64))
        x = x.reshape(B, -1, int(out_shape[-1 - i]))           # x.view(B, -1, out[-1-i])
    return x.reshape(B, -1) + np.asarray(bias, dtype=np.float64)[None, :]


# ----------------------------------------------------------------------------
# Fused Pallas kernel: one MXU matmul over the contracted weight + bias epilogue
# ----------------------------------------------------------------------------
def _tt_dense_kernel(x_ref, w_ref, b_ref, o_ref):
    # (tm, 784) @ (784, 800) on the MXU with f32 accumulation; the bias add is
    # VPU filler fused into the epilogue (no separate kernel / HBM round-trip).
    acc = jnp.dot(x_ref[...].astype(w_ref.dtype), w_ref[...],
                  preferred_element_type=jnp.float32)
    o_ref[...] = (acc + b_ref[...]).astype(o_ref.dtype)


def _round_up(n, m):
    return ((n + m - 1) // m) * m


def _pick_batch_tile(B):
    # cdiv-based tiling; Pallas masks the partial last block, so no B % tm
    # requirement and no full-array fallback that could blow VMEM.
    #  * B < 16  -> one small padded tile (kernel is weight-DMA bound anyway).
    #  * B >= 16 -> at least 2 grid steps so dimension_semantics=("parallel",)
    #    can shard the batch across both TensorCores / HBM paths on v7x,
    #    capped at 512 rows so double-buffered x/out tiles + resident W stay
    #    within v5e's 16 MiB default scoped VMEM (~85% of HBM roofline).
    if B < 16:
        return _round_up(max(B, 1), 8)
    return min(512, _round_up(pl.cdiv(B, 2), 8))


def tt_dense_forward(x, w, bias2d, out_dtype=None):
    B, K = x.shape
    Kw, N = w.shape
    assert K == Kw and bias2d.shape == (1, N)
    out_dtype = x.dtype if out_dtype is None else out_dtype
    tm = _pick_batch_tile(B)
    grid = (pl.cdiv(B, tm),)

    x_bytes = B * K * np.dtype(x.dtype).itemsize
    w_bytes = K * N * np.dtype(w.dtype).itemsize
    o_bytes = B * N * np.dtype(out_dtype).itemsize
    cost = pl.CostEstimate(
        flops=2 * B * K * N,
        transcendentals=0,
        bytes_accessed=int(x_bytes + w_bytes + N * 4 + o_bytes),
    )

    return pl.pallas_call(
        _tt_dense_kernel,
        out_shape=jax.ShapeDtypeStruct((B, N), out_dtype),
        grid=grid,
        in_specs=[
            pl.BlockSpec((tm, K), lambda i: (i, 0)),   # batch tile of x (partial-last OK)
            pl.BlockSpec((K, N), lambda i: (0, 0)),    # full weight, resident
            pl.BlockSpec((1, N), lambda i: (0, 0)),    # bias row, resident
        ],
        out_specs=pl.BlockSpec((tm, N), lambda i: (i, 0)),  # lane-dense (N=800) store
        compiler_params=pltpu.CompilerParams(
            dimension_semantics=("parallel",)),
        cost_estimate=cost,
    )(x, w, bias2d)


# ----------------------------------------------------------------------------
# Forward-equivalent of the PyTorch TTLayer
# ----------------------------------------------------------------------------
class TTLayerPallas:
    def __init__(self, in_shape, out_shape, ranks, seed=0,
                 weight_dtype=jnp.bfloat16, out_dtype=None):
        cores_arr, cores_shape, cores_indexes = _generate_orthogonal_tt_cores(
            in_shape, out_shape, ranks, seed)
        cores_indexes = list(reversed(cores_indexes))
        cores_shape = list(reversed(cores_shape))
        self.tt_output_shape = np.array(out_shape)
        self.d_in = int(np.prod(in_shape))
        self.d_out = int(np.prod(out_shape))
        self.out_dtype = out_dtype
        # Per-step weight matrices exactly as the torch forward slices them
        # (float32 Parameter -> index_select(...).view(shape)), forward order.
        self.cores = [
            cores_arr[a:b].astype(np.float32).reshape(shape)
            for (a, b), shape in zip(cores_indexes, cores_shape)
        ]
        # The chain is linear: contract it once (float64, exact forward order)
        # into W with forward(x) == x @ W + bias.
        w_dense = _chain_forward_np(
            self.cores, self.tt_output_shape,
            np.zeros(self.d_out), np.eye(self.d_in))
        self.w = jnp.asarray(w_dense, dtype=jnp.float32).astype(weight_dtype)
        # Bias stored once as a (1, N) f32 row -> no per-call reshape/cast.
        self.bias2d = jnp.zeros((1, self.d_out), dtype=jnp.float32)

    def set_bias(self, bias):
        self.bias2d = jnp.asarray(bias, dtype=jnp.float32).reshape(1, self.d_out)

    def __call__(self, x):
        return tt_dense_forward(x, self.w, self.bias2d, out_dtype=self.out_dtype)


if __name__ == "__main__":
    layer = TTLayerPallas(tt_input_shape, tt_output_shape, tt_ranks, seed=0)

    key = jax.random.PRNGKey(0)
    kx, kb, kx2 = jax.random.split(key, 3)
    B = 2
    x = jax.random.normal(kx, (B, layer.d_in), dtype=jnp.float32)

    # --- Check 1: matmul / TT-contraction semantics with ZERO bias, so the
    # tiny TT outputs (the cores are scaled by ~0.006^4) are not masked by a
    # large bias term.  Reference is the exact float64 TT chain.
    out_nb = jax.block_until_ready(
        tt_dense_forward(x, layer.w, layer.bias2d))
    assert out_nb.shape == (B, layer.d_out)
    ref_nb = _chain_forward_np(layer.cores, layer.tt_output_shape,
                               np.zeros(layer.d_out), np.asarray(x))
    # Tolerance covers bf16 weight storage + bf16-input MXU rounding (~4e-3
    # rel); any structural bug (wrong transpose/layout/contraction) gives
    # O(1) relative errors.
    scale_nb = float(np.max(np.abs(ref_nb)))
    np.testing.assert_allclose(np.asarray(out_nb), ref_nb,
                               rtol=2e-2, atol=2e-2 * scale_nb)

    # --- Check 2: fused bias epilogue, exercised with a NON-zero bias and a
    # tight tolerance (the add itself is exact f32 math; a wrong-axis or
    # broken-broadcast bias would produce O(1) relative errors here).
    bias = jax.random.normal(kb, (layer.d_out,), dtype=jnp.float32) * 0.1
    layer.set_bias(bias)
    out = jax.block_until_ready(layer(x))
    assert out.shape == (B, layer.d_out)
    ref = _chain_forward_np(layer.cores, layer.tt_output_shape,
                            np.asarray(bias), np.asarray(x))
    scale = float(np.max(np.abs(ref)))
    np.testing.assert_allclose(np.asarray(out), ref,
                               rtol=1e-5, atol=1e-5 * scale)

    # --- Check 3: cdiv grid with a non-multiple-of-8 batch (exercises the
    # multi-step grid + masked partial last block path).
    B2 = 37
    x2 = jax.random.normal(kx2, (B2, layer.d_in), dtype=jnp.float32)
    out2 = jax.block_until_ready(layer(x2))
    assert out2.shape == (B2, layer.d_out)
    ref2 = _chain_forward_np(layer.cores, layer.tt_output_shape,
                             np.asarray(bias), np.asarray(x2))
    scale2 = float(np.max(np.abs(ref2)))
    np.testing.assert_allclose(np.asarray(out2), ref2,
                               rtol=2e-2, atol=2e-2 * scale2)

    print("KERNEL_OK")
</pallas_src>

<mosaic_0001>
module attributes {stable_mosaic.version = 11 : i64} {
  func.func @_tt_dense_kernel(%arg0: i32, %arg1: memref<8x784xf32, #tpu.memory_space<vmem>>, %arg2: memref<784x800xbf16, #tpu.memory_space<vmem>>, %arg3: memref<1x800xf32, #tpu.memory_space<vmem>>, %arg4: memref<8x800xf32, #tpu.memory_space<vmem>>) attributes {dimension_semantics = [#tpu.dimension_semantics<parallel>], iteration_bounds = array<i64: 1>, scalar_prefetch = 0 : i64, scratch_operands = 0 : i64, tpu.core_type = #tpu.core_type<tc>, window_params = [{transform_indices = @transform_0, window_bounds = array<i64: 8, 784>}, {pipeline_mode = #tpu.pipeline_mode<synchronous>, transform_indices = @transform_1, window_bounds = array<i64: 784, 800>}, {pipeline_mode = #tpu.pipeline_mode<synchronous>, transform_indices = @transform_2, window_bounds = array<i64: 1, 800>}, {transform_indices = @transform_3, window_bounds = array<i64: 8, 800>}]} {
    %c0 = arith.constant 0 : index
    %c0_0 = arith.constant 0 : index
    %0 = vector.load %arg1[%c0, %c0_0] : memref<8x784xf32, #tpu.memory_space<vmem>>, vector<8x784xf32>
    %1 = arith.truncf %0 : vector<8x784xf32> to vector<8x784xbf16>
    %c0_1 = arith.constant 0 : index
    %c0_2 = arith.constant 0 : index
    %2 = vector.load %arg2[%c0_1, %c0_2] : memref<784x800xbf16, #tpu.memory_space<vmem>>, vector<784x800xbf16>
    %cst = arith.constant dense<0.000000e+00> : vector<8x800xf32>
    %3 = tpu.matmul %1, %2, %cst {dimension_numbers = #tpu.dot_dimension_numbers<[1], [0], [0], [1], [0, 0, 1, 1], [], []>} : vector<8x784xbf16>, vector<784x800xbf16>, vector<8x800xf32> -> vector<8x800xf32>
    %c0_3 = arith.constant 0 : index
    %c0_4 = arith.constant 0 : index
    %4 = vector.load %arg3[%c0_3, %c0_4] : memref<1x800xf32, #tpu.memory_space<vmem>>, vector<1x800xf32>
    %5 = vector.broadcast %4 : vector<1x800xf32> to vector<8x800xf32>
    %6 = arith.addf %3, %5 : vector<8x800xf32>
    %c0_5 = arith.constant 0 : index
    %c0_6 = arith.constant 0 : index
    %7 = vector.load %arg4[%c0_5, %c0_6] : memref<8x800xf32, #tpu.memory_space<vmem>>, vector<8x800xf32>
    tpu.vector_store %arg4[%c0_5, %c0_6], %6 {strides = array<i32>} : memref<8x800xf32, #tpu.memory_space<vmem>>, vector<8x800xf32>,
    return
  }
  func.func @transform_0(%arg0: i32) -> (i32, i32) {
    %c0_i32 = arith.constant 0 : i32
    %c0_i32_0 = arith.constant 0 : i32
    return %arg0, %c0_i32 : i32, i32
  }
  func.func @transform_1(%arg0: i32) -> (i32, i32) {
    %c0_i32 = arith.constant 0 : i32
    %c0_i32_0 = arith.constant 0 : i32
    %c0_i32_1 = arith.constant 0 : i32
    return %c0_i32, %c0_i32_0 : i32, i32
  }
  func.func @transform_2(%arg0: i32) -> (i32, i32) {
    %c0_i32 = arith.constant 0 : i32
    %c0_i32_0 = arith.constant 0 : i32
    %c0_i32_1 = arith.constant 0 : i32
    return %c0_i32, %c0_i32_0 : i32, i32
  }
  func.func @transform_3(%arg0: i32) -> (i32, i32) {
    %c0_i32 = arith.constant 0 : i32
    %c0_i32_0 = arith.constant 0 : i32
    return %arg0, %c0_i32 : i32, i32
  }
}

</mosaic_0001>

<llo_original>
// kernel: tpu_custom_call.1
$region0: #{tpu_custom_call.1}
  #allocation0 [shape = 'u32[]', space=smem, size = 0x4, offset = 0x4, fixed_abs, tag = 'smem constant byte address 0x4 - core index']
  #allocation1 [shape = 'u32[144,128]{1,0:T(1,128)}', space=vmem, size = 0x12000, scoped, tag = 'internal scratch']
  %s0 = inlined_call_operand.hbm [shape: f32[2,784], index: 0, kind: input, shape index: {}]
  %s1 = inlined_call_operand.hbm [shape: bf16[784,800], index: 1, kind: input, shape index: {}]
  %s2 = inlined_call_operand.hbm [shape: f32[1,800], index: 2, kind: input, shape index: {}]
  %s3 = inlined_call_operand.hbm [shape: f32[2,800], index: 3, kind: output, shape index: {}]
  %s4 = sld [smem:[#allocation0]]
  $region34: #{tpu_custom_call.1} parent=0
    _
  %s6 = ssub.s32 1, %s4
  %s7 = scalar_select 0, %s6, %s4
  $region1: #{tpu_custom_call.1} parent=0
    #allocation2 [shape = 'u8[28672]{0}', space=vmem, size = 0x7000, scoped, tag = 'input window, operand 0, single buffered']
    #allocation3 [shape = 's32[1]{0}', space=sflag, size = 0x4, scoped, tag = 'scoped memory for tpu_custom_call.1']
    #allocation4 [shape = 's32[1]{0}', space=sflag, size = 0x4, scoped, tag = 'scoped memory for tpu_custom_call.1']
    #allocation5 [shape = 'u8[1404928]{0}', space=vmem, size = 0x157000, scoped, tag = 'input window, operand 1, single buffered']
    #allocation6 [shape = 's32[1]{0}', space=sflag, size = 0x4, scoped, tag = 'scoped memory for tpu_custom_call.1']
    #allocation7 [shape = 'u8[3584]{0}', space=vmem, size = 0x1000, scoped, tag = 'input window, operand 2, single buffered']
    #allocation8 [shape = 'u8[28672]{0}', space=vmem, size = 0x7000, scoped, tag = 'output window, operand 0, single buffered']
    %8 = vsyncpa [#allocation3], 0
    %9 = vsyncpa [#allocation6], 0
    %10 = vsyncpa [#allocation4], 0
    // Predicated region
    $region2: #{tpu_custom_call.1} parent=1 // pred_check
      _
    $region3: #{tpu_custom_call.1} parent=1 // pred_check_branch
      %12 = sbr.rel (0) target = $region5
    $region4: #{tpu_custom_call.1} parent=1 // pred_region
      %s14 = ssub.s32 896, 224
      %15 = vsyncadd [#allocation3], %s14
      %s16 = sshll.u32 [#allocation2], 4
      %s17 = int_to_ptr.vmem [resolvable:$true] %s16
      %22 = dma.hbm_to_vmem [thread:$0]  %s0, 224, %s17, [#allocation3], 224, 224, 14
    $region5: #{tpu_custom_call.1} parent=1 // pred_fallthru
      _
    // Predicated region
    $region6: #{tpu_custom_call.1} parent=1 // pred_check
      _
    $region7: #{tpu_custom_call.1} parent=1 // pred_check_branch
      %24 = sbr.rel (0) target = $region9
    $region8: #{tpu_custom_call.1} parent=1 // pred_region
      %s26 = ssub.s32 43904, 43904
      %27 = vsyncadd [#allocation6], %s26
      %s28 = sshll.u32 [#allocation5], 4
      %s29 = int_to_ptr.vmem [resolvable:$true] %s28
      %34 = dma.hbm_to_vmem [thread:$0]  %s1, 43904, %s29, [#allocation6], 448, 448, 28
    $region9: #{tpu_custom_call.1} parent=1 // pred_fallthru
      _
    // Predicated region
    $region10: #{tpu_custom_call.1} parent=1 // pred_check
      _
    $region11: #{tpu_custom_call.1} parent=1 // pred_check_branch
      %36 = sbr.rel (0) target = $region13
    $region12: #{tpu_custom_call.1} parent=1 // pred_region
      %s38 = ssub.s32 112, 112
      %39 = vsyncadd [#allocation6], %s38
      %s41 = sshll.u32 [#allocation7], 4
      %s42 = int_to_ptr.vmem [resolvable:$true] %s41
      %44 = dma.hbm_to_vmem [thread:$0]  %s2, 112, %s42, [#allocation6]
    $region13: #{tpu_custom_call.1} parent=1 // pred_fallthru
      _
    // Predicated region
    $region14: #{tpu_custom_call.1} parent=1 // pred_check
      _
    $region15: #{tpu_custom_call.1} parent=1 // pred_check_branch
      %46 = sbr.rel (0) target = $region17
    $region16: #{tpu_custom_call.1} parent=1 // pred_region
      %47 = dma.done [#allocation3], 896
    $region17: #{tpu_custom_call.1} parent=1 // pred_fallthru
      _
    // Predicated region
    $region18: #{tpu_custom_call.1} parent=1 // pred_check
      _
    $region19: #{tpu_custom_call.1} parent=1 // pred_check_branch
      %49 = sbr.rel (0) target = $region21
    $region20: #{tpu_custom_call.1} parent=1 // pred_region
      %50 = dma.done [#allocation6], 43904
    $region21: #{tpu_custom_call.1} parent=1 // pred_fallthru
      _
    // Predicated region
    $region22: #{tpu_custom_call.1} parent=1 // pred_check
      _
    $region23: #{tpu_custom_call.1} parent=1 // pred_check_branch
      %52 = sbr.rel (0) target = $region25
    $region24: #{tpu_custom_call.1} parent=1 // pred_region
      %53 = dma.done [#allocation6], 112
    $region25: #{tpu_custom_call.1} parent=1 // pred_fallthru
      _
    %v55 = vld [vmem:[#allocation2] sm:$0xff]
    %v56 = vld [vmem:[#allocation2 + $0x8] sm:$0x3f]
    %v57 = vld [vmem:[#allocation2 + $0xe] sm:$0xff]
    %v58 = vld [vmem:[#allocation2 + $0x16] sm:$0x3f]
    %v59 = vld [vmem:[#allocation2 + $0x1c] sm:$0xff]
    %v60 = vld [vmem:[#allocation2 + $0x24] sm:$0x3f]
    %v61 = vld [vmem:[#allocation2 + $0x2a] sm:$0xff]
    %v62 = vld [vmem:[#allocation2 + $0x32] sm:$0x3f]
    %v71 = vcombine.low %v55, %v57
    %v72 = vcombine.high %v55, %v57
    %v73 = vcombine.low %v59, %v61
    %v74 = vcombine.high %v59, %v61
    %v76 = vunpack.c.l.s4 1983009808
    %v77 = vunpack.c.0.s8 %v76
    %v78 = vlaneseq
    %v79 = vshrl.u32 %v78, 7
    %v80 = vsub.s32 %v77, %v79
    %v81 = vrot.slane %v71, %v80
    %v83 = vunpack.c.l.s4 1983009808
    %v84 = vunpack.c.0.s8 %v83
    %v85 = vlaneseq
    %v86 = vshrl.u32 %v85, 7
    %v87 = vsub.s32 %v84, %v86
    %v88 = vrot.slane %v72, %v87
    %v90 = vunpack.c.l.s4 1983009808
    %v91 = vunpack.c.0.s8 %v90
    %v92 = vlaneseq
    %v93 = vshrl.u32 %v92, 7
    %v94 = vsub.s32 %v91, %v93
    %v95 = vrot.slane %v73, %v94
    %v97 = vunpack.c.l.s4 1983009808
    %v98 = vunpack.c.0.s8 %v97
    %v99 = vlaneseq
    %v100 = vshrl.u32 %v99, 7
    %v101 = vsub.s32 %v98, %v100
    %v102 = vrot.slane %v74, %v101
    %v103 = vcombine.low %v81, %v95
    %v104 = vcombine.high %v81, %v95
    %v105 = vcombine.low %v88, %v102
    %v106 = vcombine.high %v88, %v102
    %v107 = vcombine.low %v56, %v58
    %v108 = vcombine.high %v56, %v58
    %v109 = vcombine.low %v60, %v62
    %v110 = vcombine.high %v60, %v62
    %v112 = vunpack.c.l.s4 1983009808
    %v113 = vunpack.c.0.s8 %v112
    %v114 = vlaneseq
    %v115 = vshrl.u32 %v114, 7
    %v116 = vsub.s32 %v113, %v115
    %v117 = vrot.slane %v107, %v116
    %v119 = vunpack.c.l.s4 1983009808
    %v120 = vunpack.c.0.s8 %v119
    %v121 = vlaneseq
    %v122 = vshrl.u32 %v121, 7
    %v123 = vsub.s32 %v120, %v122
    %v124 = vrot.slane %v108, %v123
    %v126 = vunpack.c.l.s4 1983009808
    %v127 = vunpack.c.0.s8 %v126
    %v128 = vlaneseq
    %v129 = vshrl.u32 %v128, 7
    %v130 = vsub.s32 %v127, %v129
    %v131 = vrot.slane %v109, %v130
    %v133 = vunpack.c.l.s4 1983009808
    %v134 = vunpack.c.0.s8 %v133
    %v135 = vlaneseq
    %v136 = vshrl.u32 %v135, 7
    %v137 = vsub.s32 %v134, %v136
    %v138 = vrot.slane %v110, %v137
    %v139 = vcombine.low %v117, %v131
    %v140 = vcombine.high %v117, %v131
    %v141 = vcombine.low %v124, %v138
    %v149 = vpack.c.bf16 %v103, %v103
    %v150 = vpack.c.bf16 %v104, %v104
    %v151 = vpack.c.bf16 %v105, %v105
    %v152 = vpack.c.bf16 %v106, %v106
    %v153 = vpack.c.bf16 %v139, %v139
    %v154 = vpack.c.bf16 %v140, %v140
    %v155 = vpack.c.bf16 %v141, %v141
    %v156 = vld [vmem:[#allocation5] sm:$0xff]
    %v157 = vld [vmem:[#allocation5 + $0x8] sm:$0xff]
    %v158 = vld [vmem:[#allocation5 + $0x10] sm:$0xff]
    %v159 = vld [vmem:[#allocation5 + $0x18] sm:$0xf]
    %v160 = vld [vmem:[#allocation5 + $0x1c] sm:$0xff]
    %v161 = vld [vmem:[#allocation5 + $0x24] sm:$0xff]
    %v162 = vld [vmem:[#allocation5 + $0x2c] sm:$0xff]
    %v163 = vld [vmem:[#allocation5 + $0x34] sm:$0xf]
    %v164 = vld [vmem:[#allocation5 + $0x38] sm:$0xff]
    %v165 = vld [vmem:[#allocation5 + $0x40] sm:$0xff]
    %v166 = vld [vmem:[#allocation5 + $0x48] sm:$0xff]
    %v167 = vld [vmem:[#allocation5 + $0x50] sm:$0xf]
    %v168 = vld [vmem:[#allocation5 + $0x54] sm:$0xff]
    %v169 = vld [vmem:[#allocation5 + $0x5c] sm:$0xff]
    %v170 = vld [vmem:[#allocation5 + $0x64] sm:$0xff]
    %v171 = vld [vmem:[#allocation5 + $0x6c] sm:$0xf]
    %v172 = vld [vmem:[#allocation5 + $0x70] sm:$0xff]
    %v173 = vld [vmem:[#allocation5 + $0x78] sm:$0xff]
    %v174 = vld [vmem:[#allocation5 + $0x80] sm:$0xff]
    %v175 = vld [vmem:[#allocation5 + $0x88] sm:$0xf]
    %v176 = vld [vmem:[#allocation5 + $0x8c] sm:$0xff]
    %v177 = vld [vmem:[#allocation5 + $0x94] sm:$0xff]
    %v178 = vld [vmem:[#allocation5 + $0x9c] sm:$0xff]
    %v179 = vld [vmem:[#allocation5 + $0xa4] sm:$0xf]
    %v180 = vld [vmem:[#allocation5 + $0xa8] sm:$0xff]
    %v181 = vld [vmem:[#allocation5 + $0xb0] sm:$0xff]
    %v182 = vld [vmem:[#allocation5 + $0xb8] sm:$0xff]
    %v183 = vld [vmem:[#allocation5 + $0xc0] sm:$0xf]
    %v184 = vld [vmem:[#allocation5 + $0xc4] sm:$0xff]
    %v185 = vld [vmem:[#allocation5 + $0xcc] sm:$0xff]
    %v186 = vld [vmem:[#allocation5 + $0xd4] sm:$0xff]
    %v187 = vld [vmem:[#allocation5 + $0xdc] sm:$0xf]
    %v188 = vld [vmem:[#allocation5 + $0xe0] sm:$0xff]
    %v189 = vld [vmem:[#allocation5 + $0xe8] sm:$0xff]
    %v190 = vld [vmem:[#allocation5 + $0xf0] sm:$0xff]
    %v191 = vld [vmem:[#allocation5 + $0xf8] sm:$0xf]
    %v192 = vld [vmem:[#allocation5 + $0xfc] sm:$0xff]
    %v193 = vld [vmem:[#allocation5 + $0x104] sm:$0xff]
    %v194 = vld [vmem:[#allocation5 + $0x10c] sm:$0xff]
    %v195 = vld [vmem:[#allocation5 + $0x114] sm:$0xf]
    %v196 = vld [vmem:[#allocation5 + $0x118] sm:$0xff]
    %v197 = vld [vmem:[#allocation5 + $0x120] sm:$0xff]
    %v198 = vld [vmem:[#allocation5 + $0x128] sm:$0xff]
    %v199 = vld [vmem:[#allocation5 + $0x130] sm:$0xf]
    %v200 = vld [vmem:[#allocation5 + $0x134] sm:$0xff]
    %v201 = vld [vmem:[#allocation5 + $0x13c] sm:$0xff]
    %v202 = vld [vmem:[#allocation5 + $0x144] sm:$0xff]
    %v203 = vld [vmem:[#allocation5 + $0x14c] sm:$0xf]
    %v204 = vld [vmem:[#allocation5 + $0x150] sm:$0xff]
    %v205 = vld [vmem:[#allocation5 + $0x158] sm:$0xff]
    %v206 = vld [vmem:[#allocation5 + $0x160] sm:$0xff]
    %v207 = vld [vmem:[#allocation5 + $0x168] sm:$0xf]
    %v208 = vld [vmem:[#allocation5 + $0x16c] sm:$0xff]
    %v209 = vld [vmem:[#allocation5 + $0x174] sm:$0xff]
    %v210 = vld [vmem:[#allocation5 + $0x17c] sm:$0xff]
    %v211 = vld [vmem:[#allocation5 + $0x184] sm:$0xf]
    %v212 = vld [vmem:[#allocation5 + $0x188] sm:$0xff]
    %v213 = vld [vmem:[#allocation5 + $0x190] sm:$0xff]
    %v214 = vld [vmem:[#allocation5 + $0x198] sm:$0xff]
    %v215 = vld [vmem:[#allocation5 + $0x1a0] sm:$0xf]
    %v216 = vld [vmem:[#allocation5 + $0x1a4] sm:$0xff]
    %v217 = vld [vmem:[#allocation5 + $0x1ac] sm:$0xff]
    %v218 = vld [vmem:[#allocation5 + $0x1b4] sm:$0xff]
    %v219 = vld [vmem:[#allocation5 + $0x1bc] sm:$0xf]
    %v220 = vld [vmem:[#allocation5 + $0x1c0] sm:$0xff]
    %v221 = vld [vmem:[#allocation5 + $0x1c8] sm:$0xff]
    %v222 = vld [vmem:[#allocation5 + $0x1d0] sm:$0xff]
    %v223 = vld [vmem:[#allocation5 + $0x1d8] sm:$0xf]
    %v224 = vld [vmem:[#allocation5 + $0x1dc] sm:$0xff]
    %v225 = vld [vmem:[#allocation5 + $0x1e4] sm:$0xff]
    %v226 = vld [vmem:[#allocation5 + $0x1ec] sm:$0xff]
    %v227 = vld [vmem:[#allocation5 + $0x1f4] sm:$0xf]
    %v228 = vld [vmem:[#allocation5 + $0x1f8] sm:$0xff]
    %v229 = vld [vmem:[#allocation5 + $0x200] sm:$0xff]
    %v230 = vld [vmem:[#allocation5 + $0x208] sm:$0xff]
    %v231 = vld [vmem:[#allocation5 + $0x210] sm:$0xf]
    %v232 = vld [vmem:[#allocation5 + $0x214] sm:$0xff]
    %v233 = vld [vmem:[#allocation5 + $0x21c] sm:$0xff]
    %v234 = vld [vmem:[#allocation5 + $0x224] sm:$0xff]
    %v235 = vld [vmem:[#allocation5 + $0x22c] sm:$0xf]
    %v236 = vld [vmem:[#allocation5 + $0x230] sm:$0xff]
    %v237 = vld [vmem:[#allocation5 + $0x238] sm:$0xff]
    %v238 = vld [vmem:[#allocation5 + $0x240] sm:$0xff]
    %v239 = vld [vmem:[#allocation5 + $0x248] sm:$0xf]
    %v240 = vld [vmem:[#allocation5 + $0x24c] sm:$0xff]
    %v241 = vld [vmem:[#allocation5 + $0x254] sm:$0xff]
    %v242 = vld [vmem:[#allocation5 + $0x25c] sm:$0xff]
    %v243 = vld [vmem:[#allocation5 + $0x264] sm:$0xf]
    %v244 = vld [vmem:[#allocation5 + $0x268] sm:$0xff]
    %v245 = vld [vmem:[#allocation5 + $0x270] sm:$0xff]
    %v246 = vld [vmem:[#allocation5 + $0x278] sm:$0xff]
    %v247 = vld [vmem:[#allocation5 + $0x280] sm:$0xf]
    %v248 = vld [vmem:[#allocation5 + $0x284] sm:$0xff]
    %v249 = vld [vmem:[#allocation5 + $0x28c] sm:$0xff]
    %v250 = vld [vmem:[#allocation5 + $0x294] sm:$0xff]
    %v251 = vld [vmem:[#allocation5 + $0x29c] sm:$0xf]
    %v252 = vld [vmem:[#allocation5 + $0x2a0] sm:$0xff]
    %v253 = vld [vmem:[#allocation5 + $0x2a8] sm:$0xff]
    %v254 = vld [vmem:[#allocation5 + $0x2b0] sm:$0xff]
    %v255 = vld [vmem:[#allocation5 + $0x2b8] sm:$0xf]
    %v256 = vld [vmem:[#allocation5 + $0x2bc] sm:$0xff]
    %v257 = vld [vmem:[#allocation5 + $0x2c4] sm:$0xff]
    %v258 = vld [vmem:[#allocation5 + $0x2cc] sm:$0xff]
    %v259 = vld [vmem:[#allocation5 + $0x2d4] sm:$0xf]
    %v260 = vld [vmem:[#allocation5 + $0x2d8] sm:$0xff]
    %v261 = vld [vmem:[#allocation5 + $0x2e0] sm:$0xff]
    %v262 = vld [vmem:[#allocation5 + $0x2e8] sm:$0xff]
    %v263 = vld [vmem:[#allocation5 + $0x2f0] sm:$0xf]
    %v264 = vld [vmem:[#allocation5 + $0x2f4] sm:$0xff]
    %v265 = vld [vmem:[#allocation5 + $0x2fc] sm:$0xff]
    %v266 = vld [vmem:[#allocation5 + $0x304] sm:$0xff]
    %v267 = vld [vmem:[#allocation5 + $0x30c] sm:$0xf]
    %v268 = vld [vmem:[#allocation5 + $0x310] sm:$0xff]
    %v269 = vld [vmem:[#allocation5 + $0x318] sm:$0xff]
    %v270 = vld [vmem:[#allocation5 + $0x320] sm:$0xff]
    %v271 = vld [vmem:[#allocation5 + $0x328] sm:$0xf]
    %v272 = vld [vmem:[#allocation5 + $0x32c] sm:$0xff]
    %v273 = vld [vmem:[#allocation5 + $0x334] sm:$0xff]
    %v274 = vld [vmem:[#allocation5 + $0x33c] sm:$0xff]
    %v275 = vld [vmem:[#allocation5 + $0x344] sm:$0xf]
    %v276 = vld [vmem:[#allocation5 + $0x348] sm:$0xff]
    %v277 = vld [vmem:[#allocation5 + $0x350] sm:$0xff]
    %v278 = vld [vmem:[#allocation5 + $0x358] sm:$0xff]
    %v279 = vld [vmem:[#allocation5 + $0x360] sm:$0xf]
    %v280 = vld [vmem:[#allocation5 + $0x364] sm:$0xff]
    %v281 = vld [vmem:[#allocation5 + $0x36c] sm:$0xff]
    %v282 = vld [vmem:[#allocation5 + $0x374] sm:$0xff]
    %v283 = vld [vmem:[#allocation5 + $0x37c] sm:$0xf]
    %v284 = vld [vmem:[#allocation5 + $0x380] sm:$0xff]
    %v285 = vld [vmem:[#allocation5 + $0x388] sm:$0xff]
    %v286 = vld [vmem:[#allocation5 + $0x390] sm:$0xff]
    %v287 = vld [vmem:[#allocation5 + $0x398] sm:$0xf]
    %v288 = vld [vmem:[#allocation5 + $0x39c] sm:$0xff]
    %v289 = vld [vmem:[#allocation5 + $0x3a4] sm:$0xff]
    %v290 = vld [vmem:[#allocation5 + $0x3ac] sm:$0xff]
    %v291 = vld [vmem:[#allocation5 + $0x3b4] sm:$0xf]
    %v292 = vld [vmem:[#allocation5 + $0x3b8] sm:$0xff]
    %v293 = vld [vmem:[#allocation5 + $0x3c0] sm:$0xff]
    %v294 = vld [vmem:[#allocation5 + $0x3c8] sm:$0xff]
    %v295 = vld [vmem:[#allocation5 + $0x3d0] sm:$0xf]
    %v296 = vld [vmem:[#allocation5 + $0x3d4] sm:$0xff]
    %v297 = vld [vmem:[#allocation5 + $0x3dc] sm:$0xff]
    %v298 = vld [vmem:[#allocation5 + $0x3e4] sm:$0xff]
    %v299 = vld [vmem:[#allocation5 + $0x3ec] sm:$0xf]
    %v300 = vld [vmem:[#allocation5 + $0x3f0] sm:$0xff]
    %v301 = vld [vmem:[#allocation5 + $0x3f8] sm:$0xff]
    %v302 = vld [vmem:[#allocation5 + $0x400] sm:$0xff]
    %v303 = vld [vmem:[#allocation5 + $0x408] sm:$0xf]
    %v304 = vld [vmem:[#allocation5 + $0x40c] sm:$0xff]
    %v305 = vld [vmem:[#allocation5 + $0x414] sm:$0xff]
    %v306 = vld [vmem:[#allocation5 + $0x41c] sm:$0xff]
    %v307 = vld [vmem:[#allocation5 + $0x424] sm:$0xf]
    %v308 = vld [vmem:[#allocation5 + $0x428] sm:$0xff]
    %v309 = vld [vmem:[#allocation5 + $0x430] sm:$0xff]
    %v310 = vld [vmem:[#allocation5 + $0x438] sm:$0xff]
    %v311 = vld [vmem:[#allocation5 + $0x440] sm:$0xf]
    %v312 = vld [vmem:[#allocation5 + $0x444] sm:$0xff]
    %v313 = vld [vmem:[#allocation5 + $0x44c] sm:$0xff]
    %v314 = vld [vmem:[#allocation5 + $0x454] sm:$0xff]
    %v315 = vld [vmem:[#allocation5 + $0x45c] sm:$0xf]
    %v316 = vld [vmem:[#allocation5 + $0x460] sm:$0xff]
    %v317 = vld [vmem:[#allocation5 + $0x468] sm:$0xff]
    %v318 = vld [vmem:[#allocation5 + $0x470] sm:$0xff]
    %v319 = vld [vmem:[#allocation5 + $0x478] sm:$0xf]
    %v320 = vld [vmem:[#allocation5 + $0x47c] sm:$0xff]
    %v321 = vld [vmem:[#allocation5 + $0x484] sm:$0xff]
    %v322 = vld [vmem:[#allocation5 + $0x48c] sm:$0xff]
    %v323 = vld [vmem:[#allocation5 + $0x494] sm:$0xf]
    %v324 = vld [vmem:[#allocation5 + $0x498] sm:$0xff]
    %v325 = vld [vmem:[#allocation5 + $0x4a0] sm:$0xff]
    %v326 = vld [vmem:[#allocation5 + $0x4a8] sm:$0xff]
    %v327 = vld [vmem:[#allocation5 + $0x4b0] sm:$0xf]
    %v328 = vld [vmem:[#allocation5 + $0x4b4] sm:$0xff]
    %v329 = vld [vmem:[#allocation5 + $0x4bc] sm:$0xff]
    %v330 = vld [vmem:[#allocation5 + $0x4c4] sm:$0xff]
    %v331 = vld [vmem:[#allocation5 + $0x4cc] sm:$0xf]
    %v332 = vld [vmem:[#allocation5 + $0x4d0] sm:$0xff]
    %v333 = vld [vmem:[#allocation5 + $0x4d8] sm:$0xff]
    %v334 = vld [vmem:[#allocation5 + $0x4e0] sm:$0xff]
    %v335 = vld [vmem:[#allocation5 + $0x4e8] sm:$0xf]
    %v336 = vld [vmem:[#allocation5 + $0x4ec] sm:$0xff]
    %v337 = vld [vmem:[#allocation5 + $0x4f4] sm:$0xff]
    %v338 = vld [vmem:[#allocation5 + $0x4fc] sm:$0xff]
    %v339 = vld [vmem:[#allocation5 + $0x504] sm:$0xf]
    %v340 = vld [vmem:[#allocation5 + $0x508] sm:$0xff]
    %v341 = vld [vmem:[#allocation5 + $0x510] sm:$0xff]
    %v342 = vld [vmem:[#allocation5 + $0x518] sm:$0xff]
    %v343 = vld [vmem:[#allocation5 + $0x520] sm:$0xf]
    %v344 = vld [vmem:[#allocation5 + $0x524] sm:$0xff]
    %v345 = vld [vmem:[#allocation5 + $0x52c] sm:$0xff]
    %v346 = vld [vmem:[#allocation5 + $0x534] sm:$0xff]
    %v347 = vld [vmem:[#allocation5 + $0x53c] sm:$0xf]
    %v348 = vld [vmem:[#allocation5 + $0x540] sm:$0xff]
    %v349 = vld [vmem:[#allocation5 + $0x548] sm:$0xff]
    %v350 = vld [vmem:[#allocation5 + $0x550] sm:$0xff]
    %v351 = vld [vmem:[#allocation5 + $0x558] sm:$0xf]
    %v352 = vld [vmem:[#allocation5 + $0x55c] sm:$0xff]
    %v353 = vld [vmem:[#allocation5 + $0x564] sm:$0xff]
    %v354 = vld [vmem:[#allocation5 + $0x56c] sm:$0xff]
    %v355 = vld [vmem:[#allocation5 + $0x574] sm:$0xf]
    %v356 = vld [vmem:[#allocation5 + $0x578] sm:$0xff]
    %v357 = vld [vmem:[#allocation5 + $0x580] sm:$0xff]
    %v358 = vld [vmem:[#allocation5 + $0x588] sm:$0xff]
    %v359 = vld [vmem:[#allocation5 + $0x590] sm:$0xf]
    %v360 = vld [vmem:[#allocation5 + $0x594] sm:$0xff]
    %v361 = vld [vmem:[#allocation5 + $0x59c] sm:$0xff]
    %v362 = vld [vmem:[#allocation5 + $0x5a4] sm:$0xff]
    %v363 = vld [vmem:[#allocation5 + $0x5ac] sm:$0xf]
    %v364 = vld [vmem:[#allocation5 + $0x5b0] sm:$0xff]
    %v365 = vld [vmem:[#allocation5 + $0x5b8] sm:$0xff]
    %v366 = vld [vmem:[#allocation5 + $0x5c0] sm:$0xff]
    %v367 = vld [vmem:[#allocation5 + $0x5c8] sm:$0xf]
    %v368 = vld [vmem:[#allocation5 + $0x5cc] sm:$0xff]
    %v369 = vld [vmem:[#allocation5 + $0x5d4] sm:$0xff]
    %v370 = vld [vmem:[#allocation5 + $0x5dc] sm:$0xff]
    %v371 = vld [vmem:[#allocation5 + $0x5e4] sm:$0xf]
    %v372 = vld [vmem:[#allocation5 + $0x5e8] sm:$0xff]
    %v373 = vld [vmem:[#allocation5 + $0x5f0] sm:$0xff]
    %v374 = vld [vmem:[#allocation5 + $0x5f8] sm:$0xff]
    %v375 = vld [vmem:[#allocation5 + $0x600] sm:$0xf]
    %v376 = vld [vmem:[#allocation5 + $0x604] sm:$0xff]
    %v377 = vld [vmem:[#allocation5 + $0x60c] sm:$0xff]
    %v378 = vld [vmem:[#allocation5 + $0x614] sm:$0xff]
    %v379 = vld [vmem:[#allocation5 + $0x61c] sm:$0xf]
    %v380 = vld [vmem:[#allocation5 + $0x620] sm:$0xff]
    %v381 = vld [vmem:[#allocation5 + $0x628] sm:$0xff]
    %v382 = vld [vmem:[#allocation5 + $0x630] sm:$0xff]
    %v383 = vld [vmem:[#allocation5 + $0x638] sm:$0xf]
    %v384 = vld [vmem:[#allocation5 + $0x63c] sm:$0xff]
    %v385 = vld [vmem:[#allocation5 + $0x644] sm:$0xff]
    %v386 = vld [vmem:[#allocation5 + $0x64c] sm:$0xff]
    %v387 = vld [vmem:[#allocation5 + $0x654] sm:$0xf]
    %v388 = vld [vmem:[#allocation5 + $0x658] sm:$0xff]
    %v389 = vld [vmem:[#allocation5 + $0x660] sm:$0xff]
    %v390 = vld [vmem:[#allocation5 + $0x668] sm:$0xff]
    %v391 = vld [vmem:[#allocation5 + $0x670] sm:$0xf]
    %v392 = vld [vmem:[#allocation5 + $0x674] sm:$0xff]
    %v393 = vld [vmem:[#allocation5 + $0x67c] sm:$0xff]
    %v394 = vld [vmem:[#allocation5 + $0x684] sm:$0xff]
    %v395 = vld [vmem:[#allocation5 + $0x68c] sm:$0xf]
    %v396 = vld [vmem:[#allocation5 + $0x690] sm:$0xff]
    %v397 = vld [vmem:[#allocation5 + $0x698] sm:$0xff]
    %v398 = vld [vmem:[#allocation5 + $0x6a0] sm:$0xff]
    %v399 = vld [vmem:[#allocation5 + $0x6a8] sm:$0xf]
    %v400 = vld [vmem:[#allocation5 + $0x6ac] sm:$0xff]
    %v401 = vld [vmem:[#allocation5 + $0x6b4] sm:$0xff]
    %v402 = vld [vmem:[#allocation5 + $0x6bc] sm:$0xff]
    %v403 = vld [vmem:[#allocation5 + $0x6c4] sm:$0xf]
    %v404 = vld [vmem:[#allocation5 + $0x6c8] sm:$0xff]
    %v405 = vld [vmem:[#allocation5 + $0x6d0] sm:$0xff]
    %v406 = vld [vmem:[#allocation5 + $0x6d8] sm:$0xff]
    %v407 = vld [vmem:[#allocation5 + $0x6e0] sm:$0xf]
    %v408 = vld [vmem:[#allocation5 + $0x6e4] sm:$0xff]
    %v409 = vld [vmem:[#allocation5 + $0x6ec] sm:$0xff]
    %v410 = vld [vmem:[#allocation5 + $0x6f4] sm:$0xff]
    %v411 = vld [vmem:[#allocation5 + $0x6fc] sm:$0xf]
    %v412 = vld [vmem:[#allocation5 + $0x700] sm:$0xff]
    %v413 = vld [vmem:[#allocation5 + $0x708] sm:$0xff]
    %v414 = vld [vmem:[#allocation5 + $0x710] sm:$0xff]
    %v415 = vld [vmem:[#allocation5 + $0x718] sm:$0xf]
    %v416 = vld [vmem:[#allocation5 + $0x71c] sm:$0xff]
    %v417 = vld [vmem:[#allocation5 + $0x724] sm:$0xff]
    %v418 = vld [vmem:[#allocation5 + $0x72c] sm:$0xff]
    %v419 = vld [vmem:[#allocation5 + $0x734] sm:$0xf]
    %v420 = vld [vmem:[#allocation5 + $0x738] sm:$0xff]
    %v421 = vld [vmem:[#allocation5 + $0x740] sm:$0xff]
    %v422 = vld [vmem:[#allocation5 + $0x748] sm:$0xff]
    %v423 = vld [vmem:[#allocation5 + $0x750] sm:$0xf]
    %v424 = vld [vmem:[#allocation5 + $0x754] sm:$0xff]
    %v425 = vld [vmem:[#allocation5 + $0x75c] sm:$0xff]
    %v426 = vld [vmem:[#allocation5 + $0x764] sm:$0xff]
    %v427 = vld [vmem:[#allocation5 + $0x76c] sm:$0xf]
    %v428 = vld [vmem:[#allocation5 + $0x770] sm:$0xff]
    %v429 = vld [vmem:[#allocation5 + $0x778] sm:$0xff]
    %v430 = vld [vmem:[#allocation5 + $0x780] sm:$0xff]
    %v431 = vld [vmem:[#allocation5 + $0x788] sm:$0xf]
    %v432 = vld [vmem:[#allocation5 + $0x78c] sm:$0xff]
    %v433 = vld [vmem:[#allocation5 + $0x794] sm:$0xff]
    %v434 = vld [vmem:[#allocation5 + $0x79c] sm:$0xff]
    %v435 = vld [vmem:[#allocation5 + $0x7a4] sm:$0xf]
    %v436 = vld [vmem:[#allocation5 + $0x7a8] sm:$0xff]
    %v437 = vld [vmem:[#allocation5 + $0x7b0] sm:$0xff]
    %v438 = vld [vmem:[#allocation5 + $0x7b8] sm:$0xff]
    %v439 = vld [vmem:[#allocation5 + $0x7c0] sm:$0xf]
    %v440 = vld [vmem:[#allocation5 + $0x7c4] sm:$0xff]
    %v441 = vld [vmem:[#allocation5 + $0x7cc] sm:$0xff]
    %v442 = vld [vmem:[#allocation5 + $0x7d4] sm:$0xff]
    %v443 = vld [vmem:[#allocation5 + $0x7dc] sm:$0xf]
    %v444 = vld [vmem:[#allocation5 + $0x7e0] sm:$0xff]
    %v445 = vld [vmem:[#allocation5 + $0x7e8] sm:$0xff]
    %v446 = vld [vmem:[#allocation5 + $0x7f0] sm:$0xff]
    %v447 = vld [vmem:[#allocation5 + $0x7f8] sm:$0xf]
    %v448 = vld [vmem:[#allocation5 + $0x7fc] sm:$0xff]
    %v449 = vld [vmem:[#allocation5 + $0x804] sm:$0xff]
    %v450 = vld [vmem:[#allocation5 + $0x80c] sm:$0xff]
    %v451 = vld [vmem:[#allocation5 + $0x814] sm:$0xf]
    %v452 = vld [vmem:[#allocation5 + $0x818] sm:$0xff]
    %v453 = vld [vmem:[#allocation5 + $0x820] sm:$0xff]
    %v454 = vld [vmem:[#allocation5 + $0x828] sm:$0xff]
    %v455 = vld [vmem:[#allocation5 + $0x830] sm:$0xf]
    %v456 = vld [vmem:[#allocation5 + $0x834] sm:$0xff]
    %v457 = vld [vmem:[#allocation5 + $0x83c] sm:$0xff]
    %v458 = vld [vmem:[#allocation5 + $0x844] sm:$0xff]
    %v459 = vld [vmem:[#allocation5 + $0x84c] sm:$0xf]
    %v460 = vld [vmem:[#allocation5 + $0x850] sm:$0xff]
    %v461 = vld [vmem:[#allocation5 + $0x858] sm:$0xff]
    %v462 = vld [vmem:[#allocation5 + $0x860] sm:$0xff]
    %v463 = vld [vmem:[#allocation5 + $0x868] sm:$0xf]
    %v464 = vld [vmem:[#allocation5 + $0x86c] sm:$0xff]
    %v465 = vld [vmem:[#allocation5 + $0x874] sm:$0xff]
    %v466 = vld [vmem:[#allocation5 + $0x87c] sm:$0xff]
    %v467 = vld [vmem:[#allocation5 + $0x884] sm:$0xf]
    %v468 = vld [vmem:[#allocation5 + $0x888] sm:$0xff]
    %v469 = vld [vmem:[#allocation5 + $0x890] sm:$0xff]
    %v470 = vld [vmem:[#allocation5 + $0x898] sm:$0xff]
    %v471 = vld [vmem:[#allocation5 + $0x8a0] sm:$0xf]
    %v472 = vld [vmem:[#allocation5 + $0x8a4] sm:$0xff]
    %v473 = vld [vmem:[#allocation5 + $0x8ac] sm:$0xff]
    %v474 = vld [vmem:[#allocation5 + $0x8b4] sm:$0xff]
    %v475 = vld [vmem:[#allocation5 + $0x8bc] sm:$0xf]
    %v476 = vld [vmem:[#allocation5 + $0x8c0] sm:$0xff]
    %v477 = vld [vmem:[#allocation5 + $0x8c8] sm:$0xff]
    %v478 = vld [vmem:[#allocation5 + $0x8d0] sm:$0xff]
    %v479 = vld [vmem:[#allocation5 + $0x8d8] sm:$0xf]
    %v480 = vld [vmem:[#allocation5 + $0x8dc] sm:$0xff]
    %v481 = vld [vmem:[#allocation5 + $0x8e4] sm:$0xff]
    %v482 = vld [vmem:[#allocation5 + $0x8ec] sm:$0xff]
    %v483 = vld [vmem:[#allocation5 + $0x8f4] sm:$0xf]
    %v484 = vld [vmem:[#allocation5 + $0x8f8] sm:$0xff]
    %v485 = vld [vmem:[#allocation5 + $0x900] sm:$0xff]
    %v486 = vld [vmem:[#allocation5 + $0x908] sm:$0xff]
    %v487 = vld [vmem:[#allocation5 + $0x910] sm:$0xf]
    %v488 = vld [vmem:[#allocation5 + $0x914] sm:$0xff]
    %v489 = vld [vmem:[#allocation5 + $0x91c] sm:$0xff]
    %v490 = vld [vmem:[#allocation5 + $0x924] sm:$0xff]
    %v491 = vld [vmem:[#allocation5 + $0x92c] sm:$0xf]
    %v492 = vld [vmem:[#allocation5 + $0x930] sm:$0xff]
    %v493 = vld [vmem:[#allocation5 + $0x938] sm:$0xff]
    %v494 = vld [vmem:[#allocation5 + $0x940] sm:$0xff]
    %v495 = vld [vmem:[#allocation5 + $0x948] sm:$0xf]
    %v496 = vld [vmem:[#allocation5 + $0x94c] sm:$0xff]
    %v497 = vld [vmem:[#allocation5 + $0x954] sm:$0xff]
    %v498 = vld [vmem:[#allocation5 + $0x95c] sm:$0xff]
    %v499 = vld [vmem:[#allocation5 + $0x964] sm:$0xf]
    %v500 = vld [vmem:[#allocation5 + $0x968] sm:$0xff]
    %v501 = vld [vmem:[#allocation5 + $0x970] sm:$0xff]
    %v502 = vld [vmem:[#allocation5 + $0x978] sm:$0xff]
    %v503 = vld [vmem:[#allocation5 + $0x980] sm:$0xf]
    %v504 = vld [vmem:[#allocation5 + $0x984] sm:$0xff]
    %v505 = vld [vmem:[#allocation5 + $0x98c] sm:$0xff]
    %v506 = vld [vmem:[#allocation5 + $0x994] sm:$0xff]
    %v507 = vld [vmem:[#allocation5 + $0x99c] sm:$0xf]
    %v508 = vld [vmem:[#allocation5 + $0x9a0] sm:$0xff]
    %v509 = vld [vmem:[#allocation5 + $0x9a8] sm:$0xff]
    %v510 = vld [vmem:[#allocation5 + $0x9b0] sm:$0xff]
    %v511 = vld [vmem:[#allocation5 + $0x9b8] sm:$0xf]
    %v512 = vld [vmem:[#allocation5 + $0x9bc] sm:$0xff]
    %v513 = vld [vmem:[#allocation5 + $0x9c4] sm:$0xff]
    %v514 = vld [vmem:[#allocation5 + $0x9cc] sm:$0xff]
    %v515 = vld [vmem:[#allocation5 + $0x9d4] sm:$0xf]
    %v516 = vld [vmem:[#allocation5 + $0x9d8] sm:$0xff]
    %v517 = vld [vmem:[#allocation5 + $0x9e0] sm:$0xff]
    %v518 = vld [vmem:[#allocation5 + $0x9e8] sm:$0xff]
    %v519 = vld [vmem:[#allocation5 + $0x9f0] sm:$0xf]
    %v520 = vld [vmem:[#allocation5 + $0x9f4] sm:$0xff]
    %v521 = vld [vmem:[#allocation5 + $0x9fc] sm:$0xff]
    %v522 = vld [vmem:[#allocation5 + $0xa04] sm:$0xff]
    %v523 = vld [vmem:[#allocation5 + $0xa0c] sm:$0xf]
    %v524 = vld [vmem:[#allocation5 + $0xa10] sm:$0xff]
    %v525 = vld [vmem:[#allocation5 + $0xa18] sm:$0xff]
    %v526 = vld [vmem:[#allocation5 + $0xa20] sm:$0xff]
    %v527 = vld [vmem:[#allocation5 + $0xa28] sm:$0xf]
    %v528 = vld [vmem:[#allocation5 + $0xa2c] sm:$0xff]
    %v529 = vld [vmem:[#allocation5 + $0xa34] sm:$0xff]
    %v530 = vld [vmem:[#allocation5 + $0xa3c] sm:$0xff]
    %v531 = vld [vmem:[#allocation5 + $0xa44] sm:$0xf]
    %v532 = vld [vmem:[#allocation5 + $0xa48] sm:$0xff]
    %v533 = vld [vmem:[#allocation5 + $0xa50] sm:$0xff]
    %v534 = vld [vmem:[#allocation5 + $0xa58] sm:$0xff]
    %v535 = vld [vmem:[#allocation5 + $0xa60] sm:$0xf]
    %v536 = vld [vmem:[#allocation5 + $0xa64] sm:$0xff]
    %v537 = vld [vmem:[#allocation5 + $0xa6c] sm:$0xff]
    %v538 = vld [vmem:[#allocation5 + $0xa74] sm:$0xff]
    %v539 = vld [vmem:[#allocation5 + $0xa7c] sm:$0xf]
    %v540 = vld [vmem:[#allocation5 + $0xa80] sm:$0xff]
    %v541 = vld [vmem:[#allocation5 + $0xa88] sm:$0xff]
    %v542 = vld [vmem:[#allocation5 + $0xa90] sm:$0xff]
    %v543 = vld [vmem:[#allocation5 + $0xa98] sm:$0xf]
    %v544 = vld [vmem:[#allocation5 + $0xa9c] sm:$0xff]
    %v545 = vld [vmem:[#allocation5 + $0xaa4] sm:$0xff]
    %v546 = vld [vmem:[#allocation5 + $0xaac] sm:$0xff]
    %v547 = vld [vmem:[#allocation5 + $0xab4] sm:$0xf]
    %v548 = vld [vmem:[#allocation7] sm:$0x7f]
    %v550 = vlaneseq
    %v551 = vshrl.u32 %v550, 7
    %v552 = vsub.s32 0, %v551
    %v553 = vrot.slane %v548, %v552
    %v554 = vlaneseq
    %v555 = vshrl.u32 %v554, 7
    %v556 = vsub.s32 1, %v555
    %v557 = vrot.slane %v548, %v556
    %v558 = vlaneseq
    %v559 = vshrl.u32 %v558, 7
    %v560 = vsub.s32 2, %v559
    %v561 = vrot.slane %v548, %v560
    %v562 = vlaneseq
    %v563 = vshrl.u32 %v562, 7
    %v564 = vsub.s32 3, %v563
    %v565 = vrot.slane %v548, %v564
    %v566 = vlaneseq
    %v567 = vshrl.u32 %v566, 7
    %v568 = vsub.s32 4, %v567
    %v569 = vrot.slane %v548, %v568
    %v570 = vlaneseq
    %v571 = vshrl.u32 %v570, 7
    %v572 = vsub.s32 5, %v571
    %v573 = vrot.slane %v548, %v572
    %v574 = vlaneseq
    %v575 = vshrl.u32 %v574, 7
    %v576 = vsub.s32 6, %v575
    %v577 = vrot.slane %v548, %v576
    %v977 = vunpack.c.l.b16 %v156
    %v978 = vunpack.c.h.b16 %v156
    %v979 = vunpack.c.l.b16 %v157
    %v980 = vunpack.c.h.b16 %v157
    %v981 = vunpack.c.l.b16 %v158
    %v982 = vunpack.c.h.b16 %v158
    %v983 = vunpack.c.l.b16 %v159
    %v984 = vunpack.c.l.b16 %v160
    %v985 = vunpack.c.h.b16 %v160
    %v986 = vunpack.c.l.b16 %v161
    %v987 = vunpack.c.h.b16 %v161
    %v988 = vunpack.c.l.b16 %v162
    %v989 = vunpack.c.h.b16 %v162
    %v990 = vunpack.c.l.b16 %v163
    %v991 = vunpack.c.l.b16 %v164
    %v992 = vunpack.c.h.b16 %v164
    %v993 = vunpack.c.l.b16 %v165
    %v994 = vunpack.c.h.b16 %v165
    %v995 = vunpack.c.l.b16 %v166
    %v996 = vunpack.c.h.b16 %v166
    %v997 = vunpack.c.l.b16 %v167
    %v998 = vunpack.c.l.b16 %v168
    %v999 = vunpack.c.h.b16 %v168
    %v1000 = vunpack.c.l.b16 %v169
    %v1001 = vunpack.c.h.b16 %v169
    %v1002 = vunpack.c.l.b16 %v170
    %v1003 = vunpack.c.h.b16 %v170
    %v1004 = vunpack.c.l.b16 %v171
    %v1005 = vunpack.c.l.b16 %v172
    %v1006 = vunpack.c.h.b16 %v172
    %v1007 = vunpack.c.l.b16 %v173
    %v1008 = vunpack.c.h.b16 %v173
    %v1009 = vunpack.c.l.b16 %v174
    %v1010 = vunpack.c.h.b16 %v174
    %v1011 = vunpack.c.l.b16 %v175
    %v1012 = vunpack.c.l.b16 %v176
    %v1013 = vunpack.c.h.b16 %v176
    %v1014 = vunpack.c.l.b16 %v177
    %v1015 = vunpack.c.h.b16 %v177
    %v1016 = vunpack.c.l.b16 %v178
    %v1017 = vunpack.c.h.b16 %v178
    %v1018 = vunpack.c.l.b16 %v179
    %v1019 = vunpack.c.l.b16 %v180
    %v1020 = vunpack.c.h.b16 %v180
    %v1021 = vunpack.c.l.b16 %v181
    %v1022 = vunpack.c.h.b16 %v181
    %v1023 = vunpack.c.l.b16 %v182
    %v1024 = vunpack.c.h.b16 %v182
    %v1025 = vunpack.c.l.b16 %v183
    %v1026 = vunpack.c.l.b16 %v184
    %v1027 = vunpack.c.h.b16 %v184
    %v1028 = vunpack.c.l.b16 %v185
    %v1029 = vunpack.c.h.b16 %v185
    %v1030 = vunpack.c.l.b16 %v186
    %v1031 = vunpack.c.h.b16 %v186
    %v1032 = vunpack.c.l.b16 %v187
    %v1033 = vunpack.c.l.b16 %v188
    %v1034 = vunpack.c.h.b16 %v188
    %v1035 = vunpack.c.l.b16 %v189
    %v1036 = vunpack.c.h.b16 %v189
    %v1037 = vunpack.c.l.b16 %v190
    %v1038 = vunpack.c.h.b16 %v190
    %v1039 = vunpack.c.l.b16 %v191
    %v1040 = vunpack.c.l.b16 %v192
    %v1041 = vunpack.c.h.b16 %v192
    %v1042 = vunpack.c.l.b16 %v193
    %v1043 = vunpack.c.h.b16 %v193
    %v1044 = vunpack.c.l.b16 %v194
    %v1045 = vunpack.c.h.b16 %v194
    %v1046 = vunpack.c.l.b16 %v195
    %v1047 = vunpack.c.l.b16 %v196
    %v1048 = vunpack.c.h.b16 %v196
    %v1049 = vunpack.c.l.b16 %v197
    %v1050 = vunpack.c.h.b16 %v197
    %v1051 = vunpack.c.l.b16 %v198
    %v1052 = vunpack.c.h.b16 %v198
    %v1053 = vunpack.c.l.b16 %v199
    %v1054 = vunpack.c.l.b16 %v200
    %v1055 = vunpack.c.h.b16 %v200
    %v1056 = vunpack.c.l.b16 %v201
    %v1057 = vunpack.c.h.b16 %v201
    %v1058 = vunpack.c.l.b16 %v202
    %v1059 = vunpack.c.h.b16 %v202
    %v1060 = vunpack.c.l.b16 %v203
    %v1061 = vunpack.c.l.b16 %v204
    %v1062 = vunpack.c.h.b16 %v204
    %v1063 = vunpack.c.l.b16 %v205
    %v1064 = vunpack.c.h.b16 %v205
    %v1065 = vunpack.c.l.b16 %v206
    %v1066 = vunpack.c.h.b16 %v206
    %v1067 = vunpack.c.l.b16 %v207
    %v1068 = vunpack.c.l.b16 %v208
    %v1069 = vunpack.c.h.b16 %v208
    %v1070 = vunpack.c.l.b16 %v209
    %v1071 = vunpack.c.h.b16 %v209
    %v1072 = vunpack.c.l.b16 %v210
    %v1073 = vunpack.c.h.b16 %v210
    %v1074 = vunpack.c.l.b16 %v211
    %v1075 = vunpack.c.l.b16 %v212
    %v1076 = vunpack.c.h.b16 %v212
    %v1077 = vunpack.c.l.b16 %v213
    %v1078 = vunpack.c.h.b16 %v213
    %v1079 = vunpack.c.l.b16 %v214
    %v1080 = vunpack.c.h.b16 %v214
    %v1081 = vunpack.c.l.b16 %v215
    %v1082 = vunpack.c.l.b16 %v216
    %v1083 = vunpack.c.h.b16 %v216
    %v1084 = vunpack.c.l.b16 %v217
    %v1085 = vunpack.c.h.b16 %v217
    %v1086 = vunpack.c.l.b16 %v218
    %v1087 = vunpack.c.h.b16 %v218
    %v1088 = vunpack.c.l.b16 %v219
    %v1089 = vunpack.c.l.b16 %v220
    %v1090 = vunpack.c.h.b16 %v220
    %v1091 = vunpack.c.l.b16 %v221
    %v1092 = vunpack.c.h.b16 %v221
    %v1093 = vunpack.c.l.b16 %v222
    %v1094 = vunpack.c.h.b16 %v222
    %v1095 = vunpack.c.l.b16 %v223
    %v1096 = vunpack.c.l.b16 %v224
    %v1097 = vunpack.c.h.b16 %v224
    %v1098 = vunpack.c.l.b16 %v225
    %v1099 = vunpack.c.h.b16 %v225
    %v1100 = vunpack.c.l.b16 %v226
    %v1101 = vunpack.c.h.b16 %v226
    %v1102 = vunpack.c.l.b16 %v227
    %v1103 = vunpack.c.l.b16 %v228
    %v1104 = vunpack.c.h.b16 %v228
    %v1105 = vunpack.c.l.b16 %v229
    %v1106 = vunpack.c.h.b16 %v229
    %v1107 = vunpack.c.l.b16 %v230
    %v1108 = vunpack.c.h.b16 %v230
    %v1109 = vunpack.c.l.b16 %v231
    %v1110 = vunpack.c.l.b16 %v232
    %v1111 = vunpack.c.h.b16 %v232
    %v1112 = vunpack.c.l.b16 %v233
    %v1113 = vunpack.c.h.b16 %v233
    %v1114 = vunpack.c.l.b16 %v234
    %v1115 = vunpack.c.h.b16 %v234
    %v1116 = vunpack.c.l.b16 %v235
    %v1117 = vunpack.c.l.b16 %v236
    %v1118 = vunpack.c.h.b16 %v236
    %v1119 = vunpack.c.l.b16 %v237
    %v1120 = vunpack.c.h.b16 %v237
    %v1121 = vunpack.c.l.b16 %v238
    %v1122 = vunpack.c.h.b16 %v238
    %v1123 = vunpack.c.l.b16 %v239
    %v1124 = vunpack.c.l.b16 %v240
    %v1125 = vunpack.c.h.b16 %v240
    %v1126 = vunpack.c.l.b16 %v241
    %v1127 = vunpack.c.h.b16 %v241
    %v1128 = vunpack.c.l.b16 %v242
    %v1129 = vunpack.c.h.b16 %v242
    %v1130 = vunpack.c.l.b16 %v243
    %v1131 = vunpack.c.l.b16 %v244
    %v1132 = vunpack.c.h.b16 %v244
    %v1133 = vunpack.c.l.b16 %v245
    %v1134 = vunpack.c.h.b16 %v245
    %v1135 = vunpack.c.l.b16 %v246
    %v1136 = vunpack.c.h.b16 %v246
    %v1137 = vunpack.c.l.b16 %v247
    %v1138 = vunpack.c.l.b16 %v248
    %v1139 = vunpack.c.h.b16 %v248
    %v1140 = vunpack.c.l.b16 %v249
    %v1141 = vunpack.c.h.b16 %v249
    %v1142 = vunpack.c.l.b16 %v250
    %v1143 = vunpack.c.h.b16 %v250
    %v1144 = vunpack.c.l.b16 %v251
    %v1145 = vunpack.c.l.b16 %v252
    %v1146 = vunpack.c.h.b16 %v252
    %v1147 = vunpack.c.l.b16 %v253
    %v1148 = vunpack.c.h.b16 %v253
    %v1149 = vunpack.c.l.b16 %v254
    %v1150 = vunpack.c.h.b16 %v254
    %v1151 = vunpack.c.l.b16 %v255
    %v1152 = vunpack.c.l.b16 %v256
    %v1153 = vunpack.c.h.b16 %v256
    %v1154 = vunpack.c.l.b16 %v257
    %v1155 = vunpack.c.h.b16 %v257
    %v1156 = vunpack.c.l.b16 %v258
    %v1157 = vunpack.c.h.b16 %v258
    %v1158 = vunpack.c.l.b16 %v259
    %v1159 = vunpack.c.l.b16 %v260
    %v1160 = vunpack.c.h.b16 %v260
    %v1161 = vunpack.c.l.b16 %v261
    %v1162 = vunpack.c.h.b16 %v261
    %v1163 = vunpack.c.l.b16 %v262
    %v1164 = vunpack.c.h.b16 %v262
    %v1165 = vunpack.c.l.b16 %v263
    %v1166 = vunpack.c.l.b16 %v264
    %v1167 = vunpack.c.h.b16 %v264
    %v1168 = vunpack.c.l.b16 %v265
    %v1169 = vunpack.c.h.b16 %v265
    %v1170 = vunpack.c.l.b16 %v266
    %v1171 = vunpack.c.h.b16 %v266
    %v1172 = vunpack.c.l.b16 %v267
    %v1173 = vunpack.c.l.b16 %v268
    %v1174 = vunpack.c.h.b16 %v268
    %v1175 = vunpack.c.l.b16 %v269
    %v1176 = vunpack.c.h.b16 %v269
    %v1177 = vunpack.c.l.b16 %v270
    %v1178 = vunpack.c.h.b16 %v270
    %v1179 = vunpack.c.l.b16 %v271
    %v1180 = vunpack.c.l.b16 %v272
    %v1181 = vunpack.c.h.b16 %v272
    %v1182 = vunpack.c.l.b16 %v273
    %v1183 = vunpack.c.h.b16 %v273
    %v1184 = vunpack.c.l.b16 %v274
    %v1185 = vunpack.c.h.b16 %v274
    %v1186 = vunpack.c.l.b16 %v275
    %v1187 = vunpack.c.l.b16 %v276
    %v1188 = vunpack.c.h.b16 %v276
    %v1189 = vunpack.c.l.b16 %v277
    %v1190 = vunpack.c.h.b16 %v277
    %v1191 = vunpack.c.l.b16 %v278
    %v1192 = vunpack.c.h.b16 %v278
    %v1193 = vunpack.c.l.b16 %v279
    %v1194 = vunpack.c.l.b16 %v280
    %v1195 = vunpack.c.h.b16 %v280
    %v1196 = vunpack.c.l.b16 %v281
    %v1197 = vunpack.c.h.b16 %v281
    %v1198 = vunpack.c.l.b16 %v282
    %v1199 = vunpack.c.h.b16 %v282
    %v1200 = vunpack.c.l.b16 %v283
    %v1201 = vunpack.c.l.b16 %v284
    %v1202 = vunpack.c.h.b16 %v284
    %v1203 = vunpack.c.l.b16 %v285
    %v1204 = vunpack.c.h.b16 %v285
    %v1205 = vunpack.c.l.b16 %v286
    %v1206 = vunpack.c.h.b16 %v286
    %v1207 = vunpack.c.l.b16 %v287
    %v1208 = vunpack.c.l.b16 %v288
    %v1209 = vunpack.c.h.b16 %v288
    %v1210 = vunpack.c.l.b16 %v289
    %v1211 = vunpack.c.h.b16 %v289
    %v1212 = vunpack.c.l.b16 %v290
    %v1213 = vunpack.c.h.b16 %v290
    %v1214 = vunpack.c.l.b16 %v291
    %v1215 = vunpack.c.l.b16 %v292
    %v1216 = vunpack.c.h.b16 %v292
    %v1217 = vunpack.c.l.b16 %v293
    %v1218 = vunpack.c.h.b16 %v293
    %v1219 = vunpack.c.l.b16 %v294
    %v1220 = vunpack.c.h.b16 %v294
    %v1221 = vunpack.c.l.b16 %v295
    %v1222 = vunpack.c.l.b16 %v296
    %v1223 = vunpack.c.h.b16 %v296
    %v1224 = vunpack.c.l.b16 %v297
    %v1225 = vunpack.c.h.b16 %v297
    %v1226 = vunpack.c.l.b16 %v298
    %v1227 = vunpack.c.h.b16 %v298
    %v1228 = vunpack.c.l.b16 %v299
    %v1229 = vunpack.c.l.b16 %v300
    %v1230 = vunpack.c.h.b16 %v300
    %v1231 = vunpack.c.l.b16 %v301
    %v1232 = vunpack.c.h.b16 %v301
    %v1233 = vunpack.c.l.b16 %v302
    %v1234 = vunpack.c.h.b16 %v302
    %v1235 = vunpack.c.l.b16 %v303
    %v1236 = vunpack.c.l.b16 %v304
    %v1237 = vunpack.c.h.b16 %v304
    %v1238 = vunpack.c.l.b16 %v305
    %v1239 = vunpack.c.h.b16 %v305
    %v1240 = vunpack.c.l.b16 %v306
    %v1241 = vunpack.c.h.b16 %v306
    %v1242 = vunpack.c.l.b16 %v307
    %v1243 = vunpack.c.l.b16 %v308
    %v1244 = vunpack.c.h.b16 %v308
    %v1245 = vunpack.c.l.b16 %v309
    %v1246 = vunpack.c.h.b16 %v309
    %v1247 = vunpack.c.l.b16 %v310
    %v1248 = vunpack.c.h.b16 %v310
    %v1249 = vunpack.c.l.b16 %v311
    %v1250 = vunpack.c.l.b16 %v312
    %v1251 = vunpack.c.h.b16 %v312
    %v1252 = vunpack.c.l.b16 %v313
    %v1253 = vunpack.c.h.b16 %v313
    %v1254 = vunpack.c.l.b16 %v314
    %v1255 = vunpack.c.h.b16 %v314
    %v1256 = vunpack.c.l.b16 %v315
    %v1257 = vunpack.c.l.b16 %v316
    %v1258 = vunpack.c.h.b16 %v316
    %v1259 = vunpack.c.l.b16 %v317
    %v1260 = vunpack.c.h.b16 %v317
    %v1261 = vunpack.c.l.b16 %v318
    %v1262 = vunpack.c.h.b16 %v318
    %v1263 = vunpack.c.l.b16 %v319
    %v1264 = vunpack.c.l.b16 %v320
    %v1265 = vunpack.c.h.b16 %v320
    %v1266 = vunpack.c.l.b16 %v321
    %v1267 = vunpack.c.h.b16 %v321
    %v1268 = vunpack.c.l.b16 %v322
    %v1269 = vunpack.c.h.b16 %v322
    %v1270 = vunpack.c.l.b16 %v323
    %v1271 = vunpack.c.l.b16 %v324
    %v1272 = vunpack.c.h.b16 %v324
    %v1273 = vunpack.c.l.b16 %v325
    %v1274 = vunpack.c.h.b16 %v325
    %v1275 = vunpack.c.l.b16 %v326
    %v1276 = vunpack.c.h.b16 %v326
    %v1277 = vunpack.c.l.b16 %v327
    %v1278 = vunpack.c.l.b16 %v328
    %v1279 = vunpack.c.h.b16 %v328
    %v1280 = vunpack.c.l.b16 %v329
    %v1281 = vunpack.c.h.b16 %v329
    %v1282 = vunpack.c.l.b16 %v330
    %v1283 = vunpack.c.h.b16 %v330
    %v1284 = vunpack.c.l.b16 %v331
    %v1285 = vunpack.c.l.b16 %v332
    %v1286 = vunpack.c.h.b16 %v332
    %v1287 = vunpack.c.l.b16 %v333
    %v1288 = vunpack.c.h.b16 %v333
    %v1289 = vunpack.c.l.b16 %v334
    %v1290 = vunpack.c.h.b16 %v334
    %v1291 = vunpack.c.l.b16 %v335
    %v1292 = vunpack.c.l.b16 %v336
    %v1293 = vunpack.c.h.b16 %v336
    %v1294 = vunpack.c.l.b16 %v337
    %v1295 = vunpack.c.h.b16 %v337
    %v1296 = vunpack.c.l.b16 %v338
    %v1297 = vunpack.c.h.b16 %v338
    %v1298 = vunpack.c.l.b16 %v339
    %v1299 = vunpack.c.l.b16 %v340
    %v1300 = vunpack.c.h.b16 %v340
    %v1301 = vunpack.c.l.b16 %v341
    %v1302 = vunpack.c.h.b16 %v341
    %v1303 = vunpack.c.l.b16 %v342
    %v1304 = vunpack.c.h.b16 %v342
    %v1305 = vunpack.c.l.b16 %v343
    %v1306 = vunpack.c.l.b16 %v344
    %v1307 = vunpack.c.h.b16 %v344
    %v1308 = vunpack.c.l.b16 %v345
    %v1309 = vunpack.c.h.b16 %v345
    %v1310 = vunpack.c.l.b16 %v346
    %v1311 = vunpack.c.h.b16 %v346
    %v1312 = vunpack.c.l.b16 %v347
    %v1313 = vunpack.c.l.b16 %v348
    %v1314 = vunpack.c.h.b16 %v348
    %v1315 = vunpack.c.l.b16 %v349
    %v1316 = vunpack.c.h.b16 %v349
    %v1317 = vunpack.c.l.b16 %v350
    %v1318 = vunpack.c.h.b16 %v350
    %v1319 = vunpack.c.l.b16 %v351
    %v1320 = vunpack.c.l.b16 %v352
    %v1321 = vunpack.c.h.b16 %v352
    %v1322 = vunpack.c.l.b16 %v353
    %v1323 = vunpack.c.h.b16 %v353
    %v1324 = vunpack.c.l.b16 %v354
    %v1325 = vunpack.c.h.b16 %v354
    %v1326 = vunpack.c.l.b16 %v355
    %v1327 = vunpack.c.l.b16 %v356
    %v1328 = vunpack.c.h.b16 %v356
    %v1329 = vunpack.c.l.b16 %v357
    %v1330 = vunpack.c.h.b16 %v357
    %v1331 = vunpack.c.l.b16 %v358
    %v1332 = vunpack.c.h.b16 %v358
    %v1333 = vunpack.c.l.b16 %v359
    %v1334 = vunpack.c.l.b16 %v360
    %v1335 = vunpack.c.h.b16 %v360
    %v1336 = vunpack.c.l.b16 %v361
    %v1337 = vunpack.c.h.b16 %v361
    %v1338 = vunpack.c.l.b16 %v362
    %v1339 = vunpack.c.h.b16 %v362
    %v1340 = vunpack.c.l.b16 %v363
    %v1341 = vunpack.c.l.b16 %v364
    %v1342 = vunpack.c.h.b16 %v364
    %v1343 = vunpack.c.l.b16 %v365
    %v1344 = vunpack.c.h.b16 %v365
    %v1345 = vunpack.c.l.b16 %v366
    %v1346 = vunpack.c.h.b16 %v366
    %v1347 = vunpack.c.l.b16 %v367
    %v1348 = vunpack.c.l.b16 %v368
    %v1349 = vunpack.c.h.b16 %v368
    %v1350 = vunpack.c.l.b16 %v369
    %v1351 = vunpack.c.h.b16 %v369
    %v1352 = vunpack.c.l.b16 %v370
    %v1353 = vunpack.c.h.b16 %v370
    %v1354 = vunpack.c.l.b16 %v371
    %v1355 = vunpack.c.l.b16 %v372
    %v1356 = vunpack.c.h.b16 %v372
    %v1357 = vunpack.c.l.b16 %v373
    %v1358 = vunpack.c.h.b16 %v373
    %v1359 = vunpack.c.l.b16 %v374
    %v1360 = vunpack.c.h.b16 %v374
    %v1361 = vunpack.c.l.b16 %v375
    %v1362 = vunpack.c.l.b16 %v376
    %v1363 = vunpack.c.h.b16 %v376
    %v1364 = vunpack.c.l.b16 %v377
    %v1365 = vunpack.c.h.b16 %v377
    %v1366 = vunpack.c.l.b16 %v378
    %v1367 = vunpack.c.h.b16 %v378
    %v1368 = vunpack.c.l.b16 %v379
    %v1369 = vunpack.c.l.b16 %v380
    %v1370 = vunpack.c.h.b16 %v380
    %v1371 = vunpack.c.l.b16 %v381
    %v1372 = vunpack.c.h.b16 %v381
    %v1373 = vunpack.c.l.b16 %v382
    %v1374 = vunpack.c.h.b16 %v382
    %v1375 = vunpack.c.l.b16 %v383
    %v1376 = vunpack.c.l.b16 %v384
    %v1377 = vunpack.c.h.b16 %v384
    %v1378 = vunpack.c.l.b16 %v385
    %v1379 = vunpack.c.h.b16 %v385
    %v1380 = vunpack.c.l.b16 %v386
    %v1381 = vunpack.c.h.b16 %v386
    %v1382 = vunpack.c.l.b16 %v387
    %v1383 = vunpack.c.l.b16 %v388
    %v1384 = vunpack.c.h.b16 %v388
    %v1385 = vunpack.c.l.b16 %v389
    %v1386 = vunpack.c.h.b16 %v389
    %v1387 = vunpack.c.l.b16 %v390
    %v1388 = vunpack.c.h.b16 %v390
    %v1389 = vunpack.c.l.b16 %v391
    %v1390 = vunpack.c.l.b16 %v392
    %v1391 = vunpack.c.h.b16 %v392
    %v1392 = vunpack.c.l.b16 %v393
    %v1393 = vunpack.c.h.b16 %v393
    %v1394 = vunpack.c.l.b16 %v394
    %v1395 = vunpack.c.h.b16 %v394
    %v1396 = vunpack.c.l.b16 %v395
    %v1397 = vunpack.c.l.b16 %v396
    %v1398 = vunpack.c.h.b16 %v396
    %v1399 = vunpack.c.l.b16 %v397
    %v1400 = vunpack.c.h.b16 %v397
    %v1401 = vunpack.c.l.b16 %v398
    %v1402 = vunpack.c.h.b16 %v398
    %v1403 = vunpack.c.l.b16 %v399
    %v1404 = vunpack.c.l.b16 %v400
    %v1405 = vunpack.c.h.b16 %v400
    %v1406 = vunpack.c.l.b16 %v401
    %v1407 = vunpack.c.h.b16 %v401
    %v1408 = vunpack.c.l.b16 %v402
    %v1409 = vunpack.c.h.b16 %v402
    %v1410 = vunpack.c.l.b16 %v403
    %v1411 = vunpack.c.l.b16 %v404
    %v1412 = vunpack.c.h.b16 %v404
    %v1413 = vunpack.c.l.b16 %v405
    %v1414 = vunpack.c.h.b16 %v405
    %v1415 = vunpack.c.l.b16 %v406
    %v1416 = vunpack.c.h.b16 %v406
    %v1417 = vunpack.c.l.b16 %v407
    %v1418 = vunpack.c.l.b16 %v408
    %v1419 = vunpack.c.h.b16 %v408
    %v1420 = vunpack.c.l.b16 %v409
    %v1421 = vunpack.c.h.b16 %v409
    %v1422 = vunpack.c.l.b16 %v410
    %v1423 = vunpack.c.h.b16 %v410
    %v1424 = vunpack.c.l.b16 %v411
    %v1425 = vunpack.c.l.b16 %v412
    %v1426 = vunpack.c.h.b16 %v412
    %v1427 = vunpack.c.l.b16 %v413
    %v1428 = vunpack.c.h.b16 %v413
    %v1429 = vunpack.c.l.b16 %v414
    %v1430 = vunpack.c.h.b16 %v414
    %v1431 = vunpack.c.l.b16 %v415
    %v1432 = vunpack.c.l.b16 %v416
    %v1433 = vunpack.c.h.b16 %v416
    %v1434 = vunpack.c.l.b16 %v417
    %v1435 = vunpack.c.h.b16 %v417
    %v1436 = vunpack.c.l.b16 %v418
    %v1437 = vunpack.c.h.b16 %v418
    %v1438 = vunpack.c.l.b16 %v419
    %v1439 = vunpack.c.l.b16 %v420
    %v1440 = vunpack.c.h.b16 %v420
    %v1441 = vunpack.c.l.b16 %v421
    %v1442 = vunpack.c.h.b16 %v421
    %v1443 = vunpack.c.l.b16 %v422
    %v1444 = vunpack.c.h.b16 %v422
    %v1445 = vunpack.c.l.b16 %v423
    %v1446 = vunpack.c.l.b16 %v424
    %v1447 = vunpack.c.h.b16 %v424
    %v1448 = vunpack.c.l.b16 %v425
    %v1449 = vunpack.c.h.b16 %v425
    %v1450 = vunpack.c.l.b16 %v426
    %v1451 = vunpack.c.h.b16 %v426
    %v1452 = vunpack.c.l.b16 %v427
    %v1453 = vunpack.c.l.b16 %v428
    %v1454 = vunpack.c.h.b16 %v428
    %v1455 = vunpack.c.l.b16 %v429
    %v1456 = vunpack.c.h.b16 %v429
    %v1457 = vunpack.c.l.b16 %v430
    %v1458 = vunpack.c.h.b16 %v430
    %v1459 = vunpack.c.l.b16 %v431
    %v1460 = vunpack.c.l.b16 %v432
    %v1461 = vunpack.c.h.b16 %v432
    %v1462 = vunpack.c.l.b16 %v433
    %v1463 = vunpack.c.h.b16 %v433
    %v1464 = vunpack.c.l.b16 %v434
    %v1465 = vunpack.c.h.b16 %v434
    %v1466 = vunpack.c.l.b16 %v435
    %v1467 = vunpack.c.l.b16 %v436
    %v1468 = vunpack.c.h.b16 %v436
    %v1469 = vunpack.c.l.b16 %v437
    %v1470 = vunpack.c.h.b16 %v437
    %v1471 = vunpack.c.l.b16 %v438
    %v1472 = vunpack.c.h.b16 %v438
    %v1473 = vunpack.c.l.b16 %v439
    %v1474 = vunpack.c.l.b16 %v440
    %v1475 = vunpack.c.h.b16 %v440
    %v1476 = vunpack.c.l.b16 %v441
    %v1477 = vunpack.c.h.b16 %v441
    %v1478 = vunpack.c.l.b16 %v442
    %v1479 = vunpack.c.h.b16 %v442
    %v1480 = vunpack.c.l.b16 %v443
    %v1481 = vunpack.c.l.b16 %v444
    %v1482 = vunpack.c.h.b16 %v444
    %v1483 = vunpack.c.l.b16 %v445
    %v1484 = vunpack.c.h.b16 %v445
    %v1485 = vunpack.c.l.b16 %v446
    %v1486 = vunpack.c.h.b16 %v446
    %v1487 = vunpack.c.l.b16 %v447
    %v1488 = vunpack.c.l.b16 %v448
    %v1489 = vunpack.c.h.b16 %v448
    %v1490 = vunpack.c.l.b16 %v449
    %v1491 = vunpack.c.h.b16 %v449
    %v1492 = vunpack.c.l.b16 %v450
    %v1493 = vunpack.c.h.b16 %v450
    %v1494 = vunpack.c.l.b16 %v451
    %v1495 = vunpack.c.l.b16 %v452
    %v1496 = vunpack.c.h.b16 %v452
    %v1497 = vunpack.c.l.b16 %v453
    %v1498 = vunpack.c.h.b16 %v453
    %v1499 = vunpack.c.l.b16 %v454
    %v1500 = vunpack.c.h.b16 %v454
    %v1501 = vunpack.c.l.b16 %v455
    %v1502 = vunpack.c.l.b16 %v456
    %v1503 = vunpack.c.h.b16 %v456
    %v1504 = vunpack.c.l.b16 %v457
    %v1505 = vunpack.c.h.b16 %v457
    %v1506 = vunpack.c.l.b16 %v458
    %v1507 = vunpack.c.h.b16 %v458
    %v1508 = vunpack.c.l.b16 %v459
    %v1509 = vunpack.c.l.b16 %v460
    %v1510 = vunpack.c.h.b16 %v460
    %v1511 = vunpack.c.l.b16 %v461
    %v1512 = vunpack.c.h.b16 %v461
    %v1513 = vunpack.c.l.b16 %v462
    %v1514 = vunpack.c.h.b16 %v462
    %v1515 = vunpack.c.l.b16 %v463
    %v1516 = vunpack.c.l.b16 %v464
    %v1517 = vunpack.c.h.b16 %v464
    %v1518 = vunpack.c.l.b16 %v465
    %v1519 = vunpack.c.h.b16 %v465
    %v1520 = vunpack.c.l.b16 %v466
    %v1521 = vunpack.c.h.b16 %v466
    %v1522 = vunpack.c.l.b16 %v467
    %v1523 = vunpack.c.l.b16 %v468
    %v1524 = vunpack.c.h.b16 %v468
    %v1525 = vunpack.c.l.b16 %v469
    %v1526 = vunpack.c.h.b16 %v469
    %v1527 = vunpack.c.l.b16 %v470
    %v1528 = vunpack.c.h.b16 %v470
    %v1529 = vunpack.c.l.b16 %v471
    %v1530 = vunpack.c.l.b16 %v472
    %v1531 = vunpack.c.h.b16 %v472
    %v1532 = vunpack.c.l.b16 %v473
    %v1533 = vunpack.c.h.b16 %v473
    %v1534 = vunpack.c.l.b16 %v474
    %v1535 = vunpack.c.h.b16 %v474
    %v1536 = vunpack.c.l.b16 %v475
    %v1537 = vunpack.c.l.b16 %v476
    %v1538 = vunpack.c.h.b16 %v476
    %v1539 = vunpack.c.l.b16 %v477
    %v1540 = vunpack.c.h.b16 %v477
    %v1541 = vunpack.c.l.b16 %v478
    %v1542 = vunpack.c.h.b16 %v478
    %v1543 = vunpack.c.l.b16 %v479
    %v1544 = vunpack.c.l.b16 %v480
    %v1545 = vunpack.c.h.b16 %v480
    %v1546 = vunpack.c.l.b16 %v481
    %v1547 = vunpack.c.h.b16 %v481
    %v1548 = vunpack.c.l.b16 %v482
    %v1549 = vunpack.c.h.b16 %v482
    %v1550 = vunpack.c.l.b16 %v483
    %v1551 = vunpack.c.l.b16 %v484
    %v1552 = vunpack.c.h.b16 %v484
    %v1553 = vunpack.c.l.b16 %v485
    %v1554 = vunpack.c.h.b16 %v485
    %v1555 = vunpack.c.l.b16 %v486
    %v1556 = vunpack.c.h.b16 %v486
    %v1557 = vunpack.c.l.b16 %v487
    %v1558 = vunpack.c.l.b16 %v488
    %v1559 = vunpack.c.h.b16 %v488
    %v1560 = vunpack.c.l.b16 %v489
    %v1561 = vunpack.c.h.b16 %v489
    %v1562 = vunpack.c.l.b16 %v490
    %v1563 = vunpack.c.h.b16 %v490
    %v1564 = vunpack.c.l.b16 %v491
    %v1565 = vunpack.c.l.b16 %v492
    %v1566 = vunpack.c.h.b16 %v492
    %v1567 = vunpack.c.l.b16 %v493
    %v1568 = vunpack.c.h.b16 %v493
    %v1569 = vunpack.c.l.b16 %v494
    %v1570 = vunpack.c.h.b16 %v494
    %v1571 = vunpack.c.l.b16 %v495
    %v1572 = vunpack.c.l.b16 %v496
    %v1573 = vunpack.c.h.b16 %v496
    %v1574 = vunpack.c.l.b16 %v497
    %v1575 = vunpack.c.h.b16 %v497
    %v1576 = vunpack.c.l.b16 %v498
    %v1577 = vunpack.c.h.b16 %v498
    %v1578 = vunpack.c.l.b16 %v499
    %v1579 = vunpack.c.l.b16 %v500
    %v1580 = vunpack.c.h.b16 %v500
    %v1581 = vunpack.c.l.b16 %v501
    %v1582 = vunpack.c.h.b16 %v501
    %v1583 = vunpack.c.l.b16 %v502
    %v1584 = vunpack.c.h.b16 %v502
    %v1585 = vunpack.c.l.b16 %v503
    %v1586 = vunpack.c.l.b16 %v504
    %v1587 = vunpack.c.h.b16 %v504
    %v1588 = vunpack.c.l.b16 %v505
    %v1589 = vunpack.c.h.b16 %v505
    %v1590 = vunpack.c.l.b16 %v506
    %v1591 = vunpack.c.h.b16 %v506
    %v1592 = vunpack.c.l.b16 %v507
    %v1593 = vunpack.c.l.b16 %v508
    %v1594 = vunpack.c.h.b16 %v508
    %v1595 = vunpack.c.l.b16 %v509
    %v1596 = vunpack.c.h.b16 %v509
    %v1597 = vunpack.c.l.b16 %v510
    %v1598 = vunpack.c.h.b16 %v510
    %v1599 = vunpack.c.l.b16 %v511
    %v1600 = vunpack.c.l.b16 %v512
    %v1601 = vunpack.c.h.b16 %v512
    %v1602 = vunpack.c.l.b16 %v513
    %v1603 = vunpack.c.h.b16 %v513
    %v1604 = vunpack.c.l.b16 %v514
    %v1605 = vunpack.c.h.b16 %v514
    %v1606 = vunpack.c.l.b16 %v515
    %v1607 = vunpack.c.l.b16 %v516
    %v1608 = vunpack.c.h.b16 %v516
    %v1609 = vunpack.c.l.b16 %v517
    %v1610 = vunpack.c.h.b16 %v517
    %v1611 = vunpack.c.l.b16 %v518
    %v1612 = vunpack.c.h.b16 %v518
    %v1613 = vunpack.c.l.b16 %v519
    %v1614 = vunpack.c.l.b16 %v520
    %v1615 = vunpack.c.h.b16 %v520
    %v1616 = vunpack.c.l.b16 %v521
    %v1617 = vunpack.c.h.b16 %v521
    %v1618 = vunpack.c.l.b16 %v522
    %v1619 = vunpack.c.h.b16 %v522
    %v1620 = vunpack.c.l.b16 %v523
    %v1621 = vunpack.c.l.b16 %v524
    %v1622 = vunpack.c.h.b16 %v524
    %v1623 = vunpack.c.l.b16 %v525
    %v1624 = vunpack.c.h.b16 %v525
    %v1625 = vunpack.c.l.b16 %v526
    %v1626 = vunpack.c.h.b16 %v526
    %v1627 = vunpack.c.l.b16 %v527
    %v1628 = vunpack.c.l.b16 %v528
    %v1629 = vunpack.c.h.b16 %v528
    %v1630 = vunpack.c.l.b16 %v529
    %v1631 = vunpack.c.h.b16 %v529
    %v1632 = vunpack.c.l.b16 %v530
    %v1633 = vunpack.c.h.b16 %v530
    %v1634 = vunpack.c.l.b16 %v531
    %v1635 = vunpack.c.l.b16 %v532
    %v1636 = vunpack.c.h.b16 %v532
    %v1637 = vunpack.c.l.b16 %v533
    %v1638 = vunpack.c.h.b16 %v533
    %v1639 = vunpack.c.l.b16 %v534
    %v1640 = vunpack.c.h.b16 %v534
    %v1641 = vunpack.c.l.b16 %v535
    %v1642 = vunpack.c.l.b16 %v536
    %v1643 = vunpack.c.h.b16 %v536
    %v1644 = vunpack.c.l.b16 %v537
    %v1645 = vunpack.c.h.b16 %v537
    %v1646 = vunpack.c.l.b16 %v538
    %v1647 = vunpack.c.h.b16 %v538
    %v1648 = vunpack.c.l.b16 %v539
    %v1649 = vunpack.c.l.b16 %v540
    %v1650 = vunpack.c.h.b16 %v540
    %v1651 = vunpack.c.l.b16 %v541
    %v1652 = vunpack.c.h.b16 %v541
    %v1653 = vunpack.c.l.b16 %v542
    %v1654 = vunpack.c.h.b16 %v542
    %v1655 = vunpack.c.l.b16 %v543
    %v1656 = vunpack.c.l.b16 %v544
    %v1657 = vunpack.c.h.b16 %v544
    %v1658 = vunpack.c.l.b16 %v545
    %v1659 = vunpack.c.h.b16 %v545
    %v1660 = vunpack.c.l.b16 %v546
    %v1661 = vunpack.c.h.b16 %v546
    %v1662 = vunpack.c.l.b16 %v547
    %v1663 = vpack.c.b16 %v984, %v977
    %v1664 = vpack.c.b16 %v985, %v978
    %v1665 = vpack.c.b16 %v986, %v979
    %v1666 = vpack.c.b16 %v987, %v980
    %v1667 = vpack.c.b16 %v988, %v981
    %v1668 = vpack.c.b16 %v989, %v982
    %v1669 = vpack.c.b16 %v990, %v983
    %v1670 = vpack.c.b16 %v998, %v991
    %v1671 = vpack.c.b16 %v999, %v992
    %v1672 = vpack.c.b16 %v1000, %v993
    %v1673 = vpack.c.b16 %v1001, %v994
    %v1674 = vpack.c.b16 %v1002, %v995
    %v1675 = vpack.c.b16 %v1003, %v996
    %v1676 = vpack.c.b16 %v1004, %v997
    %v1677 = vpack.c.b16 %v1012, %v1005
    %v1678 = vpack.c.b16 %v1013, %v1006
    %v1679 = vpack.c.b16 %v1014, %v1007
    %v1680 = vpack.c.b16 %v1015, %v1008
    %v1681 = vpack.c.b16 %v1016, %v1009
    %v1682 = vpack.c.b16 %v1017, %v1010
    %v1683 = vpack.c.b16 %v1018, %v1011
    %v1684 = vpack.c.b16 %v1026, %v1019
    %v1685 = vpack.c.b16 %v1027, %v1020
    %v1686 = vpack.c.b16 %v1028, %v1021
    %v1687 = vpack.c.b16 %v1029, %v1022
    %v1688 = vpack.c.b16 %v1030, %v1023
    %v1689 = vpack.c.b16 %v1031, %v1024
    %v1690 = vpack.c.b16 %v1032, %v1025
    %v1691 = vpack.c.b16 %v1040, %v1033
    %v1692 = vpack.c.b16 %v1041, %v1034
    %v1693 = vpack.c.b16 %v1042, %v1035
    %v1694 = vpack.c.b16 %v1043, %v1036
    %v1695 = vpack.c.b16 %v1044, %v1037
    %v1696 = vpack.c.b16 %v1045, %v1038
    %v1697 = vpack.c.b16 %v1046, %v1039
    %v1698 = vpack.c.b16 %v1054, %v1047
    %v1699 = vpack.c.b16 %v1055, %v1048
    %v1700 = vpack.c.b16 %v1056, %v1049
    %v1701 = vpack.c.b16 %v1057, %v1050
    %v1702 = vpack.c.b16 %v1058, %v1051
    %v1703 = vpack.c.b16 %v1059, %v1052
    %v1704 = vpack.c.b16 %v1060, %v1053
    %v1705 = vpack.c.b16 %v1068, %v1061
    %v1706 = vpack.c.b16 %v1069, %v1062
    %v1707 = vpack.c.b16 %v1070, %v1063
    %v1708 = vpack.c.b16 %v1071, %v1064
    %v1709 = vpack.c.b16 %v1072, %v1065
    %v1710 = vpack.c.b16 %v1073, %v1066
    %v1711 = vpack.c.b16 %v1074, %v1067
    %v1712 = vpack.c.b16 %v1082, %v1075
    %v1713 = vpack.c.b16 %v1083, %v1076
    %v1714 = vpack.c.b16 %v1084, %v1077
    %v1715 = vpack.c.b16 %v1085, %v1078
    %v1716 = vpack.c.b16 %v1086, %v1079
    %v1717 = vpack.c.b16 %v1087, %v1080
    %v1718 = vpack.c.b16 %v1088, %v1081
    %v1719 = vpack.c.b16 %v1096, %v1089
    %v1720 = vpack.c.b16 %v1097, %v1090
    %v1721 = vpack.c.b16 %v1098, %v1091
    %v1722 = vpack.c.b16 %v1099, %v1092
    %v1723 = vpack.c.b16 %v1100, %v1093
    %v1724 = vpack.c.b16 %v1101, %v1094
    %v1725 = vpack.c.b16 %v1102, %v1095
    %v1726 = vpack.c.b16 %v1110, %v1103
    %v1727 = vpack.c.b16 %v1111, %v1104
    %v1728 = vpack.c.b16 %v1112, %v1105
    %v1729 = vpack.c.b16 %v1113, %v1106
    %v1730 = vpack.c.b16 %v1114, %v1107
    %v1731 = vpack.c.b16 %v1115, %v1108
    %v1732 = vpack.c.b16 %v1116, %v1109
    %v1733 = vpack.c.b16 %v1124, %v1117
    %v1734 = vpack.c.b16 %v1125, %v1118
    %v1735 = vpack.c.b16 %v1126, %v1119
    %v1736 = vpack.c.b16 %v1127, %v1120
    %v1737 = vpack.c.b16 %v1128, %v1121
    %v1738 = vpack.c.b16 %v1129, %v1122
    %v1739 = vpack.c.b16 %v1130, %v1123
    %v1740 = vpack.c.b16 %v1138, %v1131
    %v1741 = vpack.c.b16 %v1139, %v1132
    %v1742 = vpack.c.b16 %v1140, %v1133
    %v1743 = vpack.c.b16 %v1141, %v1134
    %v1744 = vpack.c.b16 %v1142, %v1135
    %v1745 = vpack.c.b16 %v1143, %v1136
    %v1746 = vpack.c.b16 %v1144, %v1137
    %v1747 = vpack.c.b16 %v1152, %v1145
    %v1748 = vpack.c.b16 %v1153, %v1146
    %v1749 = vpack.c.b16 %v1154, %v1147
    %v1750 = vpack.c.b16 %v1155, %v1148
    %v1751 = vpack.c.b16 %v1156, %v1149
    %v1752 = vpack.c.b16 %v1157, %v1150
    %v1753 = vpack.c.b16 %v1158, %v1151
    %v1754 = vpack.c.b16 %v1166, %v1159
    %v1755 = vpack.c.b16 %v1167, %v1160
    %v1756 = vpack.c.b16 %v1168, %v1161
    %v1757 = vpack.c.b16 %v1169, %v1162
    %v1758 = vpack.c.b16 %v1170, %v1163
    %v1759 = vpack.c.b16 %v1171, %v1164
    %v1760 = vpack.c.b16 %v1172, %v1165
    %v1761 = vpack.c.b16 %v1180, %v1173
    %v1762 = vpack.c.b16 %v1181, %v1174
    %v1763 = vpack.c.b16 %v1182, %v1175
    %v1764 = vpack.c.b16 %v1183, %v1176
    %v1765 = vpack.c.b16 %v1184, %v1177
    %v1766 = vpack.c.b16 %v1185, %v1178
    %v1767 = vpack.c.b16 %v1186, %v1179
    %v1768 = vpack.c.b16 %v1194, %v1187
    %v1769 = vpack.c.b16 %v1195, %v1188
    %v1770 = vpack.c.b16 %v1196, %v1189
    %v1771 = vpack.c.b16 %v1197, %v1190
    %v1772 = vpack.c.b16 %v1198, %v1191
    %v1773 = vpack.c.b16 %v1199, %v1192
    %v1774 = vpack.c.b16 %v1200, %v1193
    %v1775 = vpack.c.b16 %v1208, %v1201
    %v1776 = vpack.c.b16 %v1209, %v1202
    %v1777 = vpack.c.b16 %v1210, %v1203
    %v1778 = vpack.c.b16 %v1211, %v1204
    %v1779 = vpack.c.b16 %v1212, %v1205
    %v1780 = vpack.c.b16 %v1213, %v1206
    %v1781 = vpack.c.b16 %v1214, %v1207
    %v1782 = vpack.c.b16 %v1222, %v1215
    %v1783 = vpack.c.b16 %v1223, %v1216
    %v1784 = vpack.c.b16 %v1224, %v1217
    %v1785 = vpack.c.b16 %v1225, %v1218
    %v1786 = vpack.c.b16 %v1226, %v1219
    %v1787 = vpack.c.b16 %v1227, %v1220
    %v1788 = vpack.c.b16 %v1228, %v1221
    %v1789 = vpack.c.b16 %v1236, %v1229
    %v1790 = vpack.c.b16 %v1237, %v1230
    %v1791 = vpack.c.b16 %v1238, %v1231
    %v1792 = vpack.c.b16 %v1239, %v1232
    %v1793 = vpack.c.b16 %v1240, %v1233
    %v1794 = vpack.c.b16 %v1241, %v1234
    %v1795 = vpack.c.b16 %v1242, %v1235
    %v1796 = vpack.c.b16 %v1250, %v1243
    %v1797 = vpack.c.b16 %v1251, %v1244
    %v1798 = vpack.c.b16 %v1252, %v1245
    %v1799 = vpack.c.b16 %v1253, %v1246
    %v1800 = vpack.c.b16 %v1254, %v1247
    %v1801 = vpack.c.b16 %v1255, %v1248
    %v1802 = vpack.c.b16 %v1256, %v1249
    %v1803 = vpack.c.b16 %v1264, %v1257
    %v1804 = vpack.c.b16 %v1265, %v1258
    %v1805 = vpack.c.b16 %v1266, %v1259
    %v1806 = vpack.c.b16 %v1267, %v1260
    %v1807 = vpack.c.b16 %v1268, %v1261
    %v1808 = vpack.c.b16 %v1269, %v1262
    %v1809 = vpack.c.b16 %v1270, %v1263
    %v1810 = vpack.c.b16 %v1278, %v1271
    %v1811 = vpack.c.b16 %v1279, %v1272
    %v1812 = vpack.c.b16 %v1280, %v1273
    %v1813 = vpack.c.b16 %v1281, %v1274
    %v1814 = vpack.c.b16 %v1282, %v1275
    %v1815 = vpack.c.b16 %v1283, %v1276
    %v1816 = vpack.c.b16 %v1284, %v1277
    %v1817 = vpack.c.b16 %v1292, %v1285
    %v1818 = vpack.c.b16 %v1293, %v1286
    %v1819 = vpack.c.b16 %v1294, %v1287
    %v1820 = vpack.c.b16 %v1295, %v1288
    %v1821 = vpack.c.b16 %v1296, %v1289
    %v1822 = vpack.c.b16 %v1297, %v1290
    %v1823 = vpack.c.b16 %v1298, %v1291
    %v1824 = vpack.c.b16 %v1306, %v1299
    %v1825 = vpack.c.b16 %v1307, %v1300
    %v1826 = vpack.c.b16 %v1308, %v1301
    %v1827 = vpack.c.b16 %v1309, %v1302
    %v1828 = vpack.c.b16 %v1310, %v1303
    %v1829 = vpack.c.b16 %v1311, %v1304
    %v1830 = vpack.c.b16 %v1312, %v1305
    %v1831 = vpack.c.b16 %v1320, %v1313
    %v1832 = vpack.c.b16 %v1321, %v1314
    %v1833 = vpack.c.b16 %v1322, %v1315
    %v1834 = vpack.c.b16 %v1323, %v1316
    %v1835 = vpack.c.b16 %v1324, %v1317
    %v1836 = vpack.c.b16 %v1325, %v1318
    %v1837 = vpack.c.b16 %v1326, %v1319
    %v1838 = vpack.c.b16 %v1334, %v1327
    %v1839 = vpack.c.b16 %v1335, %v1328
    %v1840 = vpack.c.b16 %v1336, %v1329
    %v1841 = vpack.c.b16 %v1337, %v1330
    %v1842 = vpack.c.b16 %v1338, %v1331
    %v1843 = vpack.c.b16 %v1339, %v1332
    %v1844 = vpack.c.b16 %v1340, %v1333
    %v1845 = vpack.c.b16 %v1348, %v1341
    %v1846 = vpack.c.b16 %v1349, %v1342
    %v1847 = vpack.c.b16 %v1350, %v1343
    %v1848 = vpack.c.b16 %v1351, %v1344
    %v1849 = vpack.c.b16 %v1352, %v1345
    %v1850 = vpack.c.b16 %v1353, %v1346
    %v1851 = vpack.c.b16 %v1354, %v1347
    %v1852 = vpack.c.b16 %v1362, %v1355
    %v1853 = vpack.c.b16 %v1363, %v1356
    %v1854 = vpack.c.b16 %v1364, %v1357
    %v1855 = vpack.c.b16 %v1365, %v1358
    %v1856 = vpack.c.b16 %v1366, %v1359
    %v1857 = vpack.c.b16 %v1367, %v1360
    %v1858 = vpack.c.b16 %v1368, %v1361
    %v1859 = vpack.c.b16 %v1376, %v1369
    %v1860 = vpack.c.b16 %v1377, %v1370
    %v1861 = vpack.c.b16 %v1378, %v1371
    %v1862 = vpack.c.b16 %v1379, %v1372
    %v1863 = vpack.c.b16 %v1380, %v1373
    %v1864 = vpack.c.b16 %v1381, %v1374
    %v1865 = vpack.c.b16 %v1382, %v1375
    %v1866 = vpack.c.b16 %v1390, %v1383
    %v1867 = vpack.c.b16 %v1391, %v1384
    %v1868 = vpack.c.b16 %v1392, %v1385
    %v1869 = vpack.c.b16 %v1393, %v1386
    %v1870 = vpack.c.b16 %v1394, %v1387
    %v1871 = vpack.c.b16 %v1395, %v1388
    %v1872 = vpack.c.b16 %v1396, %v1389
    %v1873 = vpack.c.b16 %v1404, %v1397
    %v1874 = vpack.c.b16 %v1405, %v1398
    %v1875 = vpack.c.b16 %v1406, %v1399
    %v1876 = vpack.c.b16 %v1407, %v1400
    %v1877 = vpack.c.b16 %v1408, %v1401
    %v1878 = vpack.c.b16 %v1409, %v1402
    %v1879 = vpack.c.b16 %v1410, %v1403
    %v1880 = vpack.c.b16 %v1418, %v1411
    %v1881 = vpack.c.b16 %v1419, %v1412
    %v1882 = vpack.c.b16 %v1420, %v1413
    %v1883 = vpack.c.b16 %v1421, %v1414
    %v1884 = vpack.c.b16 %v1422, %v1415
    %v1885 = vpack.c.b16 %v1423, %v1416
    %v1886 = vpack.c.b16 %v1424, %v1417
    %v1887 = vpack.c.b16 %v1432, %v1425
    %v1888 = vpack.c.b16 %v1433, %v1426
    %v1889 = vpack.c.b16 %v1434, %v1427
    %v1890 = vpack.c.b16 %v1435, %v1428
    %v1891 = vpack.c.b16 %v1436, %v1429
    %v1892 = vpack.c.b16 %v1437, %v1430
    %v1893 = vpack.c.b16 %v1438, %v1431
    %v1894 = vpack.c.b16 %v1446, %v1439
    %v1895 = vpack.c.b16 %v1447, %v1440
    %v1896 = vpack.c.b16 %v1448, %v1441
    %v1897 = vpack.c.b16 %v1449, %v1442
    %v1898 = vpack.c.b16 %v1450, %v1443
    %v1899 = vpack.c.b16 %v1451, %v1444
    %v1900 = vpack.c.b16 %v1452, %v1445
    %v1901 = vpack.c.b16 %v1460, %v1453
    %v1902 = vpack.c.b16 %v1461, %v1454
    %v1903 = vpack.c.b16 %v1462, %v1455
    %v1904 = vpack.c.b16 %v1463, %v1456
    %v1905 = vpack.c.b16 %v1464, %v1457
    %v1906 = vpack.c.b16 %v1465, %v1458
    %v1907 = vpack.c.b16 %v1466, %v1459
    %v1908 = vpack.c.b16 %v1474, %v1467
    %v1909 = vpack.c.b16 %v1475, %v1468
    %v1910 = vpack.c.b16 %v1476, %v1469
    %v1911 = vpack.c.b16 %v1477, %v1470
    %v1912 = vpack.c.b16 %v1478, %v1471
    %v1913 = vpack.c.b16 %v1479, %v1472
    %v1914 = vpack.c.b16 %v1480, %v1473
    %v1915 = vpack.c.b16 %v1488, %v1481
    %v1916 = vpack.c.b16 %v1489, %v1482
    %v1917 = vpack.c.b16 %v1490, %v1483
    %v1918 = vpack.c.b16 %v1491, %v1484
    %v1919 = vpack.c.b16 %v1492, %v1485
    %v1920 = vpack.c.b16 %v1493, %v1486
    %v1921 = vpack.c.b16 %v1494, %v1487
    %v1922 = vpack.c.b16 %v1502, %v1495
    %v1923 = vpack.c.b16 %v1503, %v1496
    %v1924 = vpack.c.b16 %v1504, %v1497
    %v1925 = vpack.c.b16 %v1505, %v1498
    %v1926 = vpack.c.b16 %v1506, %v1499
    %v1927 = vpack.c.b16 %v1507, %v1500
    %v1928 = vpack.c.b16 %v1508, %v1501
    %v1929 = vpack.c.b16 %v1516, %v1509
    %v1930 = vpack.c.b16 %v1517, %v1510
    %v1931 = vpack.c.b16 %v1518, %v1511
    %v1932 = vpack.c.b16 %v1519, %v1512
    %v1933 = vpack.c.b16 %v1520, %v1513
    %v1934 = vpack.c.b16 %v1521, %v1514
    %v1935 = vpack.c.b16 %v1522, %v1515
    %v1936 = vpack.c.b16 %v1530, %v1523
    %v1937 = vpack.c.b16 %v1531, %v1524
    %v1938 = vpack.c.b16 %v1532, %v1525
    %v1939 = vpack.c.b16 %v1533, %v1526
    %v1940 = vpack.c.b16 %v1534, %v1527
    %v1941 = vpack.c.b16 %v1535, %v1528
    %v1942 = vpack.c.b16 %v1536, %v1529
    %v1943 = vpack.c.b16 %v1544, %v1537
    %v1944 = vpack.c.b16 %v1545, %v1538
    %v1945 = vpack.c.b16 %v1546, %v1539
    %v1946 = vpack.c.b16 %v1547, %v1540
    %v1947 = vpack.c.b16 %v1548, %v1541
    %v1948 = vpack.c.b16 %v1549, %v1542
    %v1949 = vpack.c.b16 %v1550, %v1543
    %v1950 = vpack.c.b16 %v1558, %v1551
    %v1951 = vpack.c.b16 %v1559, %v1552
    %v1952 = vpack.c.b16 %v1560, %v1553
    %v1953 = vpack.c.b16 %v1561, %v1554
    %v1954 = vpack.c.b16 %v1562, %v1555
    %v1955 = vpack.c.b16 %v1563, %v1556
    %v1956 = vpack.c.b16 %v1564, %v1557
    %v1957 = vpack.c.b16 %v1572, %v1565
    %v1958 = vpack.c.b16 %v1573, %v1566
    %v1959 = vpack.c.b16 %v1574, %v1567
    %v1960 = vpack.c.b16 %v1575, %v1568
    %v1961 = vpack.c.b16 %v1576, %v1569
    %v1962 = vpack.c.b16 %v1577, %v1570
    %v1963 = vpack.c.b16 %v1578, %v1571
    %v1964 = vpack.c.b16 %v1586, %v1579
    %v1965 = vpack.c.b16 %v1587, %v1580
    %v1966 = vpack.c.b16 %v1588, %v1581
    %v1967 = vpack.c.b16 %v1589, %v1582
    %v1968 = vpack.c.b16 %v1590, %v1583
    %v1969 = vpack.c.b16 %v1591, %v1584
    %v1970 = vpack.c.b16 %v1592, %v1585
    %v1971 = vpack.c.b16 %v1600, %v1593
    %v1972 = vpack.c.b16 %v1601, %v1594
    %v1973 = vpack.c.b16 %v1602, %v1595
    %v1974 = vpack.c.b16 %v1603, %v1596
    %v1975 = vpack.c.b16 %v1604, %v1597
    %v1976 = vpack.c.b16 %v1605, %v1598
    %v1977 = vpack.c.b16 %v1606, %v1599
    %v1978 = vpack.c.b16 %v1614, %v1607
    %v1979 = vpack.c.b16 %v1615, %v1608
    %v1980 = vpack.c.b16 %v1616, %v1609
    %v1981 = vpack.c.b16 %v1617, %v1610
    %v1982 = vpack.c.b16 %v1618, %v1611
    %v1983 = vpack.c.b16 %v1619, %v1612
    %v1984 = vpack.c.b16 %v1620, %v1613
    %v1985 = vpack.c.b16 %v1628, %v1621
    %v1986 = vpack.c.b16 %v1629, %v1622
    %v1987 = vpack.c.b16 %v1630, %v1623
    %v1988 = vpack.c.b16 %v1631, %v1624
    %v1989 = vpack.c.b16 %v1632, %v1625
    %v1990 = vpack.c.b16 %v1633, %v1626
    %v1991 = vpack.c.b16 %v1634, %v1627
    %v1992 = vpack.c.b16 %v1642, %v1635
    %v1993 = vpack.c.b16 %v1643, %v1636
    %v1994 = vpack.c.b16 %v1644, %v1637
    %v1995 = vpack.c.b16 %v1645, %v1638
    %v1996 = vpack.c.b16 %v1646, %v1639
    %v1997 = vpack.c.b16 %v1647, %v1640
    %v1998 = vpack.c.b16 %v1648, %v1641
    %v1999 = vpack.c.b16 %v1656, %v1649
    %v2000 = vpack.c.b16 %v1657, %v1650
    %v2001 = vpack.c.b16 %v1658, %v1651
    %v2002 = vpack.c.b16 %v1659, %v1652
    %v2003 = vpack.c.b16 %v1660, %v1653
    %v2004 = vpack.c.b16 %v1661, %v1654
    %v2005 = vpack.c.b16 %v1662, %v1655
    %vm2349 = vcmask 130048
    %v2351 = vsel %vm2349, %v155, 0
    %2353 = vmatprep.subr.bf16.mxu0 %v1664
    %2354 = vmatpush1.bf16.msra.mxu0 %v1663
    %2355 = vmatprep.subr.bf16.mxu0 %v1671
    %2356 = vmatpush1.bf16.msra.mxu0 %v1670
    %2357 = vmatprep.subr.bf16.mxu0 %v1678
    %2358 = vmatpush1.bf16.msra.mxu0 %v1677
    %2359 = vmatprep.subr.bf16.mxu0 %v1685
    %2360 = vmatpush1.bf16.msra.mxu0 %v1684
    %2361 = vmatprep.subr.bf16.mxu0 %v1692
    %2362 = vmatpush1.bf16.msra.mxu0 %v1691
    %2363 = vmatprep.subr.bf16.mxu0 %v1699
    %2364 = vmatpush1.bf16.msra.mxu0 %v1698
    %2365 = vmatprep.subr.bf16.mxu0 %v1706
    %2366 = vmatpush1.bf16.msra.mxu0 %v1705
    %2367 = vmatprep.subr.bf16.mxu0 %v1713
    %2368 = vmatpush1.bf16.msra.mxu0 %v1712
    %2369 = vmatprep.subr.bf16.mxu0 %v1720
    %2370 = vmatpush1.bf16.msra.mxu0 %v1719
    %2371 = vmatprep.subr.bf16.mxu0 %v1727
    %2372 = vmatpush1.bf16.msra.mxu0 %v1726
    %2373 = vmatprep.subr.bf16.mxu0 %v1734
    %2374 = vmatpush1.bf16.msra.mxu0 %v1733
    %2375 = vmatprep.subr.bf16.mxu0 %v1741
    %2376 = vmatpush1.bf16.msra.mxu0 %v1740
    %2377 = vmatprep.subr.bf16.mxu0 %v1748
    %2378 = vmatpush1.bf16.msra.mxu0 %v1747
    %2379 = vmatprep.subr.bf16.mxu0 %v1755
    %2380 = vmatpush1.bf16.msra.mxu0 %v1754
    %2381 = vmatprep.subr.bf16.mxu0 %v1762
    %2382 = vmatpush1.bf16.msra.mxu0 %v1761
    %2383 = vmatprep.subr.bf16.mxu0 %v1769
    %2384 = vmatpush1.bf16.msra.mxu0 %v1768
    %2385 = vmatprep.mubr.bf16.mxu0 %v150
    %2386 = vmatmul.mubr.bf16.gmra.mrb[0].mxu0 %v149
    %v2387 = vpop.f32.mrb[0].mxu0
    %v2388 = vadd.f32 %v553, %v2387
    %v2389 = vpop.f32.mrb[0].mxu0
    %v2390 = vadd.f32 %v557, %v2389
    %v2391 = vpop.f32.mrb[0].mxu0
    %v2392 = vpop.f32.mrb[0].mxu0
    %2393 = vdwg.mxu0
    %2394 = vmatprep.subr.bf16.mxu0 %v1776
    %2395 = vmatpush1.bf16.msra.mxu0 %v1775
    %2396 = vmatprep.subr.bf16.mxu0 %v1783
    %2397 = vmatpush1.bf16.msra.mxu0 %v1782
    %2398 = vmatprep.subr.bf16.mxu0 %v1790
    %2399 = vmatpush1.bf16.msra.mxu0 %v1789
    %2400 = vmatprep.subr.bf16.mxu0 %v1797
    %2401 = vmatpush1.bf16.msra.mxu0 %v1796
    %2402 = vmatprep.subr.bf16.mxu0 %v1804
    %2403 = vmatpush1.bf16.msra.mxu0 %v1803
    %2404 = vmatprep.subr.bf16.mxu0 %v1811
    %2405 = vmatpush1.bf16.msra.mxu0 %v1810
    %2406 = vmatprep.subr.bf16.mxu0 %v1818
    %2407 = vmatpush1.bf16.msra.mxu0 %v1817
    %2408 = vmatprep.subr.bf16.mxu0 %v1825
    %2409 = vmatpush1.bf16.msra.mxu0 %v1824
    %2410 = vmatprep.subr.bf16.mxu0 %v1832
    %2411 = vmatpush1.bf16.msra.mxu0 %v1831
    %2412 = vmatprep.subr.bf16.mxu0 %v1839
    %2413 = vmatpush1.bf16.msra.mxu0 %v1838
    %2414 = vmatprep.subr.bf16.mxu0 %v1846
    %2415 = vmatpush1.bf16.msra.mxu0 %v1845
    %2416 = vmatprep.subr.bf16.mxu0 %v1853
    %2417 = vmatpush1.bf16.msra.mxu0 %v1852
    %2418 = vmatprep.subr.bf16.mxu0 %v1860
    %2419 = vmatpush1.bf16.msra.mxu0 %v1859
    %2420 = vmatprep.subr.bf16.mxu0 %v1867
    %2421 = vmatpush1.bf16.msra.mxu0 %v1866
    %2422 = vmatprep.subr.bf16.mxu0 %v1874
    %2423 = vmatpush1.bf16.msra.mxu0 %v1873
    %2424 = vmatprep.subr.bf16.mxu0 %v1881
    %2425 = vmatpush1.bf16.msra.mxu0 %v1880
    %2426 = vmatprep.mubr.bf16.mxu0 %v152
    %2427 = vmatmul.mubr.bf16.gmra.mrb[0].mxu0 %v151
    %v2428 = vpop.f32.mrb[0].mxu0
    %v2429 = vadd.f32 %v2388, %v2428
    %v2430 = vpop.f32.mrb[0].mxu0
    %v2431 = vadd.f32 %v2390, %v2430
    %v2432 = vpop.f32.mrb[0].mxu0
    %v2433 = vpop.f32.mrb[0].mxu0
    %2434 = vdwg.mxu0
    %2435 = vmatprep.subr.bf16.mxu0 %v1888
    %2436 = vmatpush1.bf16.msra.mxu0 %v1887
    %2437 = vmatprep.subr.bf16.mxu0 %v1895
    %2438 = vmatpush1.bf16.msra.mxu0 %v1894
    %2439 = vmatprep.subr.bf16.mxu0 %v1902
    %2440 = vmatpush1.bf16.msra.mxu0 %v1901
    %2441 = vmatprep.subr.bf16.mxu0 %v1909
    %2442 = vmatpush1.bf16.msra.mxu0 %v1908
    %2443 = vmatprep.subr.bf16.mxu0 %v1916
    %2444 = vmatpush1.bf16.msra.mxu0 %v1915
    %2445 = vmatprep.subr.bf16.mxu0 %v1923
    %2446 = vmatpush1.bf16.msra.mxu0 %v1922
    %2447 = vmatprep.subr.bf16.mxu0 %v1930
    %2448 = vmatpush1.bf16.msra.mxu0 %v1929
    %2449 = vmatprep.subr.bf16.mxu0 %v1937
    %2450 = vmatpush1.bf16.msra.mxu0 %v1936
    %2451 = vmatprep.subr.bf16.mxu0 %v1944
    %2452 = vmatpush1.bf16.msra.mxu0 %v1943
    %2453 = vmatprep.subr.bf16.mxu0 %v1951
    %2454 = vmatpush1.bf16.msra.mxu0 %v1950
    %2455 = vmatprep.subr.bf16.mxu0 %v1958
    %2456 = vmatpush1.bf16.msra.mxu0 %v1957
    %2457 = vmatprep.subr.bf16.mxu0 %v1965
    %2458 = vmatpush1.bf16.msra.mxu0 %v1964
    %2459 = vmatprep.subr.bf16.mxu0 %v1972
    %2460 = vmatpush1.bf16.msra.mxu0 %v1971
    %2461 = vmatprep.subr.bf16.mxu0 %v1979
    %2462 = vmatpush1.bf16.msra.mxu0 %v1978
    %2463 = vmatprep.subr.bf16.mxu0 %v1986
    %2464 = vmatpush1.bf16.msra.mxu0 %v1985
    %2465 = vmatprep.subr.bf16.mxu0 %v1993
    %2466 = vmatpush1.bf16.msra.mxu0 %v1992
    %2467 = vmatprep.mubr.bf16.mxu0 %v154
    %2468 = vmatmul.mubr.bf16.gmra.mrb[0].mxu0 %v153
    %v2469 = vpop.f32.mrb[0].mxu0
    %v2470 = vadd.f32 %v2429, %v2469
    %v2471 = vpop.f32.mrb[0].mxu0
    %v2472 = vadd.f32 %v2431, %v2471
    %v2473 = vpop.f32.mrb[0].mxu0
    %v2474 = vpop.f32.mrb[0].mxu0
    %2475 = vdwg.mxu0
    %2476 = vmatprep.subr.bf16.mxu0 %v2000
    %2477 = vmatpush1.bf16.msra.mxu0 %v1999
    %2478 = vmatprep.subr.bf16.mxu0 0
    %2479 = vmatpush1.bf16.msra.mxu0 0
    %2480 = vmatprep.subr.bf16.mxu0 0
    %2481 = vmatpush1.bf16.msra.mxu0 0
    %2482 = vmatprep.subr.bf16.mxu0 0
    %2483 = vmatpush1.bf16.msra.mxu0 0
    %2484 = vmatprep.subr.bf16.mxu0 0
    %2485 = vmatpush1.bf16.msra.mxu0 0
    %2486 = vmatprep.subr.bf16.mxu0 0
    %2487 = vmatpush1.bf16.msra.mxu0 0
    %2488 = vmatprep.subr.bf16.mxu0 0
    %2489 = vmatpush1.bf16.msra.mxu0 0
    %2490 = vmatprep.subr.bf16.mxu0 0
    %2491 = vmatpush1.bf16.msra.mxu0 0
    %2492 = vmatprep.subr.bf16.mxu0 0
    %2493 = vmatpush1.bf16.msra.mxu0 0
    %2494 = vmatprep.subr.bf16.mxu0 0
    %2495 = vmatpush1.bf16.msra.mxu0 0
    %2496 = vmatprep.subr.bf16.mxu0 0
    %2497 = vmatpush1.bf16.msra.mxu0 0
    %2498 = vmatprep.subr.bf16.mxu0 0
    %2499 = vmatpush1.bf16.msra.mxu0 0
    %2500 = vmatprep.subr.bf16.mxu0 0
    %2501 = vmatpush1.bf16.msra.mxu0 0
    %2502 = vmatprep.subr.bf16.mxu0 0
    %2503 = vmatpush1.bf16.msra.mxu0 0
    %2504 = vmatprep.subr.bf16.mxu0 0
    %2505 = vmatpush1.bf16.msra.mxu0 0
    %2506 = vmatprep.subr.bf16.mxu0 0
    %2507 = vmatpush1.bf16.msra.mxu0 0
    %2508 = vmatprep.mubr.bf16.mxu0 0
    %2509 = vmatmul.mubr.bf16.gmra.mrb[0].mxu0 %v2351
    %v2510 = vpop.f32.mrb[0].mxu0
    %v2511 = vadd.f32 %v2470, %v2510
    %v2512 = vpop.f32.mrb[0].mxu0
    %v2513 = vadd.f32 %v2472, %v2512
    %v2514 = vpop.f32.mrb[0].mxu0
    %v2515 = vpop.f32.mrb[0].mxu0
    %2516 = vdwg.mxu0
    %2517 = vmatprep.subr.bf16.mxu0 %v1666
    %2518 = vmatpush1.bf16.msra.mxu0 %v1665
    %2519 = vmatprep.subr.bf16.mxu0 %v1673
    %2520 = vmatpush1.bf16.msra.mxu0 %v1672
    %2521 = vmatprep.subr.bf16.mxu0 %v1680
    %2522 = vmatpush1.bf16.msra.mxu0 %v1679
    %2523 = vmatprep.subr.bf16.mxu0 %v1687
    %2524 = vmatpush1.bf16.msra.mxu0 %v1686
    %2525 = vmatprep.subr.bf16.mxu0 %v1694
    %2526 = vmatpush1.bf16.msra.mxu0 %v1693
    %2527 = vmatprep.subr.bf16.mxu0 %v1701
    %2528 = vmatpush1.bf16.msra.mxu0 %v1700
    %2529 = vmatprep.subr.bf16.mxu0 %v1708
    %2530 = vmatpush1.bf16.msra.mxu0 %v1707
    %2531 = vmatprep.subr.bf16.mxu0 %v1715
    %2532 = vmatpush1.bf16.msra.mxu0 %v1714
    %2533 = vmatprep.subr.bf16.mxu0 %v1722
    %2534 = vmatpush1.bf16.msra.mxu0 %v1721
    %2535 = vmatprep.subr.bf16.mxu0 %v1729
    %2536 = vmatpush1.bf16.msra.mxu0 %v1728
    %2537 = vmatprep.subr.bf16.mxu0 %v1736
    %2538 = vmatpush1.bf16.msra.mxu0 %v1735
    %2539 = vmatprep.subr.bf16.mxu0 %v1743
    %2540 = vmatpush1.bf16.msra.mxu0 %v1742
    %2541 = vmatprep.subr.bf16.mxu0 %v1750
    %2542 = vmatpush1.bf16.msra.mxu0 %v1749
    %2543 = vmatprep.subr.bf16.mxu0 %v1757
    %2544 = vmatpush1.bf16.msra.mxu0 %v1756
    %2545 = vmatprep.subr.bf16.mxu0 %v1764
    %2546 = vmatpush1.bf16.msra.mxu0 %v1763
    %2547 = vmatprep.subr.bf16.mxu0 %v1771
    %2548 = vmatpush1.bf16.msra.mxu0 %v1770
    %2549 = vmatprep.mubr.bf16.mxu0 %v150
    %2550 = vmatmul.mubr.bf16.gmra.mrb[0].mxu0 %v149
    %v2551 = vpop.f32.mrb[0].mxu0
    %v2552 = vadd.f32 %v561, %v2551
    %v2553 = vpop.f32.mrb[0].mxu0
    %v2554 = vadd.f32 %v565, %v2553
    %v2555 = vpop.f32.mrb[0].mxu0
    %v2556 = vpop.f32.mrb[0].mxu0
    %2557 = vdwg.mxu0
    %2558 = vmatprep.subr.bf16.mxu0 %v1778
    %2559 = vmatpush1.bf16.msra.mxu0 %v1777
    %2560 = vmatprep.subr.bf16.mxu0 %v1785
    %2561 = vmatpush1.bf16.msra.mxu0 %v1784
    %2562 = vmatprep.subr.bf16.mxu0 %v1792
    %2563 = vmatpush1.bf16.msra.mxu0 %v1791
    %2564 = vmatprep.subr.bf16.mxu0 %v1799
    %2565 = vmatpush1.bf16.msra.mxu0 %v1798
    %2566 = vmatprep.subr.bf16.mxu0 %v1806
    %2567 = vmatpush1.bf16.msra.mxu0 %v1805
    %2568 = vmatprep.subr.bf16.mxu0 %v1813
    %2569 = vmatpush1.bf16.msra.mxu0 %v1812
    %2570 = vmatprep.subr.bf16.mxu0 %v1820
    %2571 = vmatpush1.bf16.msra.mxu0 %v1819
    %2572 = vmatprep.subr.bf16.mxu0 %v1827
    %2573 = vmatpush1.bf16.msra.mxu0 %v1826
    %2574 = vmatprep.subr.bf16.mxu0 %v1834
    %2575 = vmatpush1.bf16.msra.mxu0 %v1833
    %2576 = vmatprep.subr.bf16.mxu0 %v1841
    %2577 = vmatpush1.bf16.msra.mxu0 %v1840
    %2578 = vmatprep.subr.bf16.mxu0 %v1848
    %2579 = vmatpush1.bf16.msra.mxu0 %v1847
    %2580 = vmatprep.subr.bf16.mxu0 %v1855
    %2581 = vmatpush1.bf16.msra.mxu0 %v1854
    %2582 = vmatprep.subr.bf16.mxu0 %v1862
    %2583 = vmatpush1.bf16.msra.mxu0 %v1861
    %2584 = vmatprep.subr.bf16.mxu0 %v1869
    %2585 = vmatpush1.bf16.msra.mxu0 %v1868
    %2586 = vmatprep.subr.bf16.mxu0 %v1876
    %2587 = vmatpush1.bf16.msra.mxu0 %v1875
    %2588 = vmatprep.subr.bf16.mxu0 %v1883
    %2589 = vmatpush1.bf16.msra.mxu0 %v1882
    %2590 = vmatprep.mubr.bf16.mxu0 %v152
    %2591 = vmatmul.mubr.bf16.gmra.mrb[0].mxu0 %v151
    %v2592 = vpop.f32.mrb[0].mxu0
    %v2593 = vadd.f32 %v2552, %v2592
    %v2594 = vpop.f32.mrb[0].mxu0
    %v2595 = vadd.f32 %v2554, %v2594
    %v2596 = vpop.f32.mrb[0].mxu0
    %v2597 = vpop.f32.mrb[0].mxu0
    %2598 = vdwg.mxu0
    %2599 = vmatprep.subr.bf16.mxu0 %v1890
    %2600 = vmatpush1.bf16.msra.mxu0 %v1889
    %2601 = vmatprep.subr.bf16.mxu0 %v1897
    %2602 = vmatpush1.bf16.msra.mxu0 %v1896
    %2603 = vmatprep.subr.bf16.mxu0 %v1904
    %2604 = vmatpush1.bf16.msra.mxu0 %v1903
    %2605 = vmatprep.subr.bf16.mxu0 %v1911
    %2606 = vmatpush1.bf16.msra.mxu0 %v1910
    %2607 = vmatprep.subr.bf16.mxu0 %v1918
    %2608 = vmatpush1.bf16.msra.mxu0 %v1917
    %2609 = vmatprep.subr.bf16.mxu0 %v1925
    %2610 = vmatpush1.bf16.msra.mxu0 %v1924
    %2611 = vmatprep.subr.bf16.mxu0 %v1932
    %2612 = vmatpush1.bf16.msra.mxu0 %v1931
    %2613 = vmatprep.subr.bf16.mxu0 %v1939
    %2614 = vmatpush1.bf16.msra.mxu0 %v1938
    %2615 = vmatprep.subr.bf16.mxu0 %v1946
    %2616 = vmatpush1.bf16.msra.mxu0 %v1945
    %2617 = vmatprep.subr.bf16.mxu0 %v1953
    %2618 = vmatpush1.bf16.msra.mxu0 %v1952
    %2619 = vmatprep.subr.bf16.mxu0 %v1960
    %2620 = vmatpush1.bf16.msra.mxu0 %v1959
    %2621 = vmatprep.subr.bf16.mxu0 %v1967
    %2622 = vmatpush1.bf16.msra.mxu0 %v1966
    %2623 = vmatprep.subr.bf16.mxu0 %v1974
    %2624 = vmatpush1.bf16.msra.mxu0 %v1973
    %2625 = vmatprep.subr.bf16.mxu0 %v1981
    %2626 = vmatpush1.bf16.msra.mxu0 %v1980
    %2627 = vmatprep.subr.bf16.mxu0 %v1988
    %2628 = vmatpush1.bf16.msra.mxu0 %v1987
    %2629 = vmatprep.subr.bf16.mxu0 %v1995
    %2630 = vmatpush1.bf16.msra.mxu0 %v1994
    %2631 = vmatprep.mubr.bf16.mxu0 %v154
    %2632 = vmatmul.mubr.bf16.gmra.mrb[0].mxu0 %v153
    %v2633 = vpop.f32.mrb[0].mxu0
    %v2634 = vadd.f32 %v2593, %v2633
    %v2635 = vpop.f32.mrb[0].mxu0
    %v2636 = vadd.f32 %v2595, %v2635
    %v2637 = vpop.f32.mrb[0].mxu0
    %v2638 = vpop.f32.mrb[0].mxu0
    %2639 = vdwg.mxu0
    %2640 = vmatprep.subr.bf16.mxu0 %v2002
    %2641 = vmatpush1.bf16.msra.mxu0 %v2001
    %2642 = vmatprep.subr.bf16.mxu0 0
    %2643 = vmatpush1.bf16.msra.mxu0 0
    %2644 = vmatprep.subr.bf16.mxu0 0
    %2645 = vmatpush1.bf16.msra.mxu0 0
    %2646 = vmatprep.subr.bf16.mxu0 0
    %2647 = vmatpush1.bf16.msra.mxu0 0
    %2648 = vmatprep.subr.bf16.mxu0 0
    %2649 = vmatpush1.bf16.msra.mxu0 0
    %2650 = vmatprep.subr.bf16.mxu0 0
    %2651 = vmatpush1.bf16.msra.mxu0 0
    %2652 = vmatprep.subr.bf16.mxu0 0
    %2653 = vmatpush1.bf16.msra.mxu0 0
    %2654 = vmatprep.subr.bf16.mxu0 0
    %2655 = vmatpush1.bf16.msra.mxu0 0
    %2656 = vmatprep.subr.bf16.mxu0 0
    %2657 = vmatpush1.bf16.msra.mxu0 0
    %2658 = vmatprep.subr.bf16.mxu0 0
    %2659 = vmatpush1.bf16.msra.mxu0 0
    %2660 = vmatprep.subr.bf16.mxu0 0
    %2661 = vmatpush1.bf16.msra.mxu0 0
    %2662 = vmatprep.subr.bf16.mxu0 0
    %2663 = vmatpush1.bf16.msra.mxu0 0
    %2664 = vmatprep.subr.bf16.mxu0 0
    %2665 = vmatpush1.bf16.msra.mxu0 0
    %2666 = vmatprep.subr.bf16.mxu0 0
    %2667 = vmatpush1.bf16.msra.mxu0 0
    %2668 = vmatprep.subr.bf16.mxu0 0
    %2669 = vmatpush1.bf16.msra.mxu0 0
    %2670 = vmatprep.subr.bf16.mxu0 0
    %2671 = vmatpush1.bf16.msra.mxu0 0
    %2672 = vmatprep.mubr.bf16.mxu0 0
    %2673 = vmatmul.mubr.bf16.gmra.mrb[0].mxu0 %v2351
    %v2674 = vpop.f32.mrb[0].mxu0
    %v2675 = vadd.f32 %v2634, %v2674
    %v2676 = vpop.f32.mrb[0].mxu0
    %v2677 = vadd.f32 %v2636, %v2676
    %v2678 = vpop.f32.mrb[0].mxu0
    %v2679 = vpop.f32.mrb[0].mxu0
    %2680 = vdwg.mxu0
    %2681 = vmatprep.subr.bf16.mxu0 %v1668
    %2682 = vmatpush1.bf16.msra.mxu0 %v1667
    %2683 = vmatprep.subr.bf16.mxu0 %v1675
    %2684 = vmatpush1.bf16.msra.mxu0 %v1674
    %2685 = vmatprep.subr.bf16.mxu0 %v1682
    %2686 = vmatpush1.bf16.msra.mxu0 %v1681
    %2687 = vmatprep.subr.bf16.mxu0 %v1689
    %2688 = vmatpush1.bf16.msra.mxu0 %v1688
    %2689 = vmatprep.subr.bf16.mxu0 %v1696
    %2690 = vmatpush1.bf16.msra.mxu0 %v1695
    %2691 = vmatprep.subr.bf16.mxu0 %v1703
    %2692 = vmatpush1.bf16.msra.mxu0 %v1702
    %2693 = vmatprep.subr.bf16.mxu0 %v1710
    %2694 = vmatpush1.bf16.msra.mxu0 %v1709
    %2695 = vmatprep.subr.bf16.mxu0 %v1717
    %2696 = vmatpush1.bf16.msra.mxu0 %v1716
    %2697 = vmatprep.subr.bf16.mxu0 %v1724
    %2698 = vmatpush1.bf16.msra.mxu0 %v1723
    %2699 = vmatprep.subr.bf16.mxu0 %v1731
    %2700 = vmatpush1.bf16.msra.mxu0 %v1730
    %2701 = vmatprep.subr.bf16.mxu0 %v1738
    %2702 = vmatpush1.bf16.msra.mxu0 %v1737
    %2703 = vmatprep.subr.bf16.mxu0 %v1745
    %2704 = vmatpush1.bf16.msra.mxu0 %v1744
    %2705 = vmatprep.subr.bf16.mxu0 %v1752
    %2706 = vmatpush1.bf16.msra.mxu0 %v1751
    %2707 = vmatprep.subr.bf16.mxu0 %v1759
    %2708 = vmatpush1.bf16.msra.mxu0 %v1758
    %2709 = vmatprep.subr.bf16.mxu0 %v1766
    %2710 = vmatpush1.bf16.msra.mxu0 %v1765
    %2711 = vmatprep.subr.bf16.mxu0 %v1773
    %2712 = vmatpush1.bf16.msra.mxu0 %v1772
    %2713 = vmatprep.mubr.bf16.mxu0 %v150
    %2714 = vmatmul.mubr.bf16.gmra.mrb[0].mxu0 %v149
    %v2715 = vpop.f32.mrb[0].mxu0
    %v2716 = vadd.f32 %v569, %v2715
    %v2717 = vpop.f32.mrb[0].mxu0
    %v2718 = vadd.f32 %v573, %v2717
    %v2719 = vpop.f32.mrb[0].mxu0
    %v2720 = vpop.f32.mrb[0].mxu0
    %2721 = vdwg.mxu0
    %2722 = vmatprep.subr.bf16.mxu0 %v1780
    %2723 = vmatpush1.bf16.msra.mxu0 %v1779
    %2724 = vmatprep.subr.bf16.mxu0 %v1787
    %2725 = vmatpush1.bf16.msra.mxu0 %v1786
    %2726 = vmatprep.subr.bf16.mxu0 %v1794
    %2727 = vmatpush1.bf16.msra.mxu0 %v1793
    %2728 = vmatprep.subr.bf16.mxu0 %v1801
    %2729 = vmatpush1.bf16.msra.mxu0 %v1800
    %2730 = vmatprep.subr.bf16.mxu0 %v1808
    %2731 = vmatpush1.bf16.msra.mxu0 %v1807
    %2732 = vmatprep.subr.bf16.mxu0 %v1815
    %2733 = vmatpush1.bf16.msra.mxu0 %v1814
    %2734 = vmatprep.subr.bf16.mxu0 %v1822
    %2735 = vmatpush1.bf16.msra.mxu0 %v1821
    %2736 = vmatprep.subr.bf16.mxu0 %v1829
    %2737 = vmatpush1.bf16.msra.mxu0 %v1828
    %2738 = vmatprep.subr.bf16.mxu0 %v1836
    %2739 = vmatpush1.bf16.msra.mxu0 %v1835
    %2740 = vmatprep.subr.bf16.mxu0 %v1843
    %2741 = vmatpush1.bf16.msra.mxu0 %v1842
    %2742 = vmatprep.subr.bf16.mxu0 %v1850
    %2743 = vmatpush1.bf16.msra.mxu0 %v1849
    %2744 = vmatprep.subr.bf16.mxu0 %v1857
    %2745 = vmatpush1.bf16.msra.mxu0 %v1856
    %2746 = vmatprep.subr.bf16.mxu0 %v1864
    %2747 = vmatpush1.bf16.msra.mxu0 %v1863
    %2748 = vmatprep.subr.bf16.mxu0 %v1871
    %2749 = vmatpush1.bf16.msra.mxu0 %v1870
    %2750 = vmatprep.subr.bf16.mxu0 %v1878
    %2751 = vmatpush1.bf16.msra.mxu0 %v1877
    %2752 = vmatprep.subr.bf16.mxu0 %v1885
    %2753 = vmatpush1.bf16.msra.mxu0 %v1884
    %2754 = vmatprep.mubr.bf16.mxu0 %v152
    %2755 = vmatmul.mubr.bf16.gmra.mrb[0].mxu0 %v151
    %v2756 = vpop.f32.mrb[0].mxu0
    %v2757 = vadd.f32 %v2716, %v2756
    %v2758 = vpop.f32.mrb[0].mxu0
    %v2759 = vadd.f32 %v2718, %v2758
    %v2760 = vpop.f32.mrb[0].mxu0
    %v2761 = vpop.f32.mrb[0].mxu0
    %2762 = vdwg.mxu0
    %2763 = vmatprep.subr.bf16.mxu0 %v1892
    %2764 = vmatpush1.bf16.msra.mxu0 %v1891
    %2765 = vmatprep.subr.bf16.mxu0 %v1899
    %2766 = vmatpush1.bf16.msra.mxu0 %v1898
    %2767 = vmatprep.subr.bf16.mxu0 %v1906
    %2768 = vmatpush1.bf16.msra.mxu0 %v1905
    %2769 = vmatprep.subr.bf16.mxu0 %v1913
    %2770 = vmatpush1.bf16.msra.mxu0 %v1912
    %2771 = vmatprep.subr.bf16.mxu0 %v1920
    %2772 = vmatpush1.bf16.msra.mxu0 %v1919
    %2773 = vmatprep.subr.bf16.mxu0 %v1927
    %2774 = vmatpush1.bf16.msra.mxu0 %v1926
    %2775 = vmatprep.subr.bf16.mxu0 %v1934
    %2776 = vmatpush1.bf16.msra.mxu0 %v1933
    %2777 = vmatprep.subr.bf16.mxu0 %v1941
    %2778 = vmatpush1.bf16.msra.mxu0 %v1940
    %2779 = vmatprep.subr.bf16.mxu0 %v1948
    %2780 = vmatpush1.bf16.msra.mxu0 %v1947
    %2781 = vmatprep.subr.bf16.mxu0 %v1955
    %2782 = vmatpush1.bf16.msra.mxu0 %v1954
    %2783 = vmatprep.subr.bf16.mxu0 %v1962
    %2784 = vmatpush1.bf16.msra.mxu0 %v1961
    %2785 = vmatprep.subr.bf16.mxu0 %v1969
    %2786 = vmatpush1.bf16.msra.mxu0 %v1968
    %2787 = vmatprep.subr.bf16.mxu0 %v1976
    %2788 = vmatpush1.bf16.msra.mxu0 %v1975
    %2789 = vmatprep.subr.bf16.mxu0 %v1983
    %2790 = vmatpush1.bf16.msra.mxu0 %v1982
    %2791 = vmatprep.subr.bf16.mxu0 %v1990
    %2792 = vmatpush1.bf16.msra.mxu0 %v1989
    %2793 = vmatprep.subr.bf16.mxu0 %v1997
    %2794 = vmatpush1.bf16.msra.mxu0 %v1996
    %2795 = vmatprep.mubr.bf16.mxu0 %v154
    %2796 = vmatmul.mubr.bf16.gmra.mrb[0].mxu0 %v153
    %v2797 = vpop.f32.mrb[0].mxu0
    %v2798 = vadd.f32 %v2757, %v2797
    %v2799 = vpop.f32.mrb[0].mxu0
    %v2800 = vadd.f32 %v2759, %v2799
    %v2801 = vpop.f32.mrb[0].mxu0
    %v2802 = vpop.f32.mrb[0].mxu0
    %2803 = vdwg.mxu0
    %2804 = vmatprep.subr.bf16.mxu0 %v2004
    %2805 = vmatpush1.bf16.msra.mxu0 %v2003
    %2806 = vmatprep.subr.bf16.mxu0 0
    %2807 = vmatpush1.bf16.msra.mxu0 0
    %2808 = vmatprep.subr.bf16.mxu0 0
    %2809 = vmatpush1.bf16.msra.mxu0 0
    %2810 = vmatprep.subr.bf16.mxu0 0
    %2811 = vmatpush1.bf16.msra.mxu0 0
    %2812 = vmatprep.subr.bf16.mxu0 0
    %2813 = vmatpush1.bf16.msra.mxu0 0
    %2814 = vmatprep.subr.bf16.mxu0 0
    %2815 = vmatpush1.bf16.msra.mxu0 0
    %2816 = vmatprep.subr.bf16.mxu0 0
    %2817 = vmatpush1.bf16.msra.mxu0 0
    %2818 = vmatprep.subr.bf16.mxu0 0
    %2819 = vmatpush1.bf16.msra.mxu0 0
    %2820 = vmatprep.subr.bf16.mxu0 0
    %2821 = vmatpush1.bf16.msra.mxu0 0
    %2822 = vmatprep.subr.bf16.mxu0 0
    %2823 = vmatpush1.bf16.msra.mxu0 0
    %2824 = vmatprep.subr.bf16.mxu0 0
    %2825 = vmatpush1.bf16.msra.mxu0 0
    %2826 = vmatprep.subr.bf16.mxu0 0
    %2827 = vmatpush1.bf16.msra.mxu0 0
    %2828 = vmatprep.subr.bf16.mxu0 0
    %2829 = vmatpush1.bf16.msra.mxu0 0
    %2830 = vmatprep.subr.bf16.mxu0 0
    %2831 = vmatpush1.bf16.msra.mxu0 0
    %2832 = vmatprep.subr.bf16.mxu0 0
    %2833 = vmatpush1.bf16.msra.mxu0 0
    %2834 = vmatprep.subr.bf16.mxu0 0
    %2835 = vmatpush1.bf16.msra.mxu0 0
    %2836 = vmatprep.mubr.bf16.mxu0 0
    %2837 = vmatmul.mubr.bf16.gmra.mrb[0].mxu0 %v2351
    %v2838 = vpop.f32.mrb[0].mxu0
    %v2839 = vadd.f32 %v2798, %v2838
    %v2840 = vpop.f32.mrb[0].mxu0
    %v2841 = vadd.f32 %v2800, %v2840
    %v2842 = vpop.f32.mrb[0].mxu0
    %v2843 = vpop.f32.mrb[0].mxu0
    %2844 = vdwg.mxu0
    %2845 = vmatprep.subr.bf16.mxu0 0
    %2846 = vmatpush1.bf16.msra.mxu0 %v1669
    %2847 = vmatprep.subr.bf16.mxu0 0
    %2848 = vmatpush1.bf16.msra.mxu0 %v1676
    %2849 = vmatprep.subr.bf16.mxu0 0
    %2850 = vmatpush1.bf16.msra.mxu0 %v1683
    %2851 = vmatprep.subr.bf16.mxu0 0
    %2852 = vmatpush1.bf16.msra.mxu0 %v1690
    %2853 = vmatprep.subr.bf16.mxu0 0
    %2854 = vmatpush1.bf16.msra.mxu0 %v1697
    %2855 = vmatprep.subr.bf16.mxu0 0
    %2856 = vmatpush1.bf16.msra.mxu0 %v1704
    %2857 = vmatprep.subr.bf16.mxu0 0
    %2858 = vmatpush1.bf16.msra.mxu0 %v1711
    %2859 = vmatprep.subr.bf16.mxu0 0
    %2860 = vmatpush1.bf16.msra.mxu0 %v1718
    %2861 = vmatprep.subr.bf16.mxu0 0
    %2862 = vmatpush1.bf16.msra.mxu0 %v1725
    %2863 = vmatprep.subr.bf16.mxu0 0
    %2864 = vmatpush1.bf16.msra.mxu0 %v1732
    %2865 = vmatprep.subr.bf16.mxu0 0
    %2866 = vmatpush1.bf16.msra.mxu0 %v1739
    %2867 = vmatprep.subr.bf16.mxu0 0
    %2868 = vmatpush1.bf16.msra.mxu0 %v1746
    %2869 = vmatprep.subr.bf16.mxu0 0
    %2870 = vmatpush1.bf16.msra.mxu0 %v1753
    %2871 = vmatprep.subr.bf16.mxu0 0
    %2872 = vmatpush1.bf16.msra.mxu0 %v1760
    %2873 = vmatprep.subr.bf16.mxu0 0
    %2874 = vmatpush1.bf16.msra.mxu0 %v1767
    %2875 = vmatprep.subr.bf16.mxu0 0
    %2876 = vmatpush1.bf16.msra.mxu0 %v1774
    %2877 = vmatprep.mubr.bf16.mxu0 %v150
    %2878 = vmatmul.mubr.bf16.gmra.mrb[0].mxu0 %v149
    %v2879 = vpop.f32.mrb[0].mxu0
    %v2880 = vadd.f32 %v577, %v2879
    %v2881 = vpop.f32.mrb[0].mxu0
    %v2882 = vpop.f32.mrb[0].mxu0
    %v2883 = vpop.f32.mrb[0].mxu0
    %2884 = vdwg.mxu0
    %2885 = vmatprep.subr.bf16.mxu0 0
    %2886 = vmatpush1.bf16.msra.mxu0 %v1781
    %2887 = vmatprep.subr.bf16.mxu0 0
    %2888 = vmatpush1.bf16.msra.mxu0 %v1788
    %2889 = vmatprep.subr.bf16.mxu0 0
    %2890 = vmatpush1.bf16.msra.mxu0 %v1795
    %2891 = vmatprep.subr.bf16.mxu0 0
    %2892 = vmatpush1.bf16.msra.mxu0 %v1802
    %2893 = vmatprep.subr.bf16.mxu0 0
    %2894 = vmatpush1.bf16.msra.mxu0 %v1809
    %2895 = vmatprep.subr.bf16.mxu0 0
    %2896 = vmatpush1.bf16.msra.mxu0 %v1816
    %2897 = vmatprep.subr.bf16.mxu0 0
    %2898 = vmatpush1.bf16.msra.mxu0 %v1823
    %2899 = vmatprep.subr.bf16.mxu0 0
    %2900 = vmatpush1.bf16.msra.mxu0 %v1830
    %2901 = vmatprep.subr.bf16.mxu0 0
    %2902 = vmatpush1.bf16.msra.mxu0 %v1837
    %2903 = vmatprep.subr.bf16.mxu0 0
    %2904 = vmatpush1.bf16.msra.mxu0 %v1844
    %2905 = vmatprep.subr.bf16.mxu0 0
    %2906 = vmatpush1.bf16.msra.mxu0 %v1851
    %2907 = vmatprep.subr.bf16.mxu0 0
    %2908 = vmatpush1.bf16.msra.mxu0 %v1858
    %2909 = vmatprep.subr.bf16.mxu0 0
    %2910 = vmatpush1.bf16.msra.mxu0 %v1865
    %2911 = vmatprep.subr.bf16.mxu0 0
    %2912 = vmatpush1.bf16.msra.mxu0 %v1872
    %2913 = vmatprep.subr.bf16.mxu0 0
    %2914 = vmatpush1.bf16.msra.mxu0 %v1879
    %2915 = vmatprep.subr.bf16.mxu0 0
    %2916 = vmatpush1.bf16.msra.mxu0 %v1886
    %2917 = vmatprep.mubr.bf16.mxu0 %v152
    %2918 = vmatmul.mubr.bf16.gmra.mrb[0].mxu0 %v151
    %v2919 = vpop.f32.mrb[0].mxu0
    %v2920 = vadd.f32 %v2880, %v2919
    %v2921 = vpop.f32.mrb[0].mxu0
    %v2922 = vpop.f32.mrb[0].mxu0
    %v2923 = vpop.f32.mrb[0].mxu0
    %2924 = vdwg.mxu0
    %2925 = vmatprep.subr.bf16.mxu0 0
    %2926 = vmatpush1.bf16.msra.mxu0 %v1893
    %2927 = vmatprep.subr.bf16.mxu0 0
    %2928 = vmatpush1.bf16.msra.mxu0 %v1900
    %2929 = vmatprep.subr.bf16.mxu0 0
    %2930 = vmatpush1.bf16.msra.mxu0 %v1907
    %2931 = vmatprep.subr.bf16.mxu0 0
    %2932 = vmatpush1.bf16.msra.mxu0 %v1914
    %2933 = vmatprep.subr.bf16.mxu0 0
    %2934 = vmatpush1.bf16.msra.mxu0 %v1921
    %2935 = vmatprep.subr.bf16.mxu0 0
    %2936 = vmatpush1.bf16.msra.mxu0 %v1928
    %2937 = vmatprep.subr.bf16.mxu0 0
    %2938 = vmatpush1.bf16.msra.mxu0 %v1935
    %2939 = vmatprep.subr.bf16.mxu0 0
    %2940 = vmatpush1.bf16.msra.mxu0 %v1942
    %2941 = vmatprep.subr.bf16.mxu0 0
    %2942 = vmatpush1.bf16.msra.mxu0 %v1949
    %2943 = vmatprep.subr.bf16.mxu0 0
    %2944 = vmatpush1.bf16.msra.mxu0 %v1956
    %2945 = vmatprep.subr.bf16.mxu0 0
    %2946 = vmatpush1.bf16.msra.mxu0 %v1963
    %2947 = vmatprep.subr.bf16.mxu0 0
    %2948 = vmatpush1.bf16.msra.mxu0 %v1970
    %2949 = vmatprep.subr.bf16.mxu0 0
    %2950 = vmatpush1.bf16.msra.mxu0 %v1977
    %2951 = vmatprep.subr.bf16.mxu0 0
    %2952 = vmatpush1.bf16.msra.mxu0 %v1984
    %2953 = vmatprep.subr.bf16.mxu0 0
    %2954 = vmatpush1.bf16.msra.mxu0 %v1991
    %2955 = vmatprep.subr.bf16.mxu0 0
    %2956 = vmatpush1.bf16.msra.mxu0 %v1998
    %2957 = vmatprep.mubr.bf16.mxu0 %v154
    %2958 = vmatmul.mubr.bf16.gmra.mrb[0].mxu0 %v153
    %v2959 = vpop.f32.mrb[0].mxu0
    %v2960 = vadd.f32 %v2920, %v2959
    %v2961 = vpop.f32.mrb[0].mxu0
    %v2962 = vpop.f32.mrb[0].mxu0
    %v2963 = vpop.f32.mrb[0].mxu0
    %2964 = vdwg.mxu0
    %2965 = vmatprep.subr.bf16.mxu0 0
    %2966 = vmatpush1.bf16.msra.mxu0 %v2005
    %2967 = vmatprep.subr.bf16.mxu0 0
    %2968 = vmatpush1.bf16.msra.mxu0 0
    %2969 = vmatprep.subr.bf16.mxu0 0
    %2970 = vmatpush1.bf16.msra.mxu0 0
    %2971 = vmatprep.subr.bf16.mxu0 0
    %2972 = vmatpush1.bf16.msra.mxu0 0
    %2973 = vmatprep.subr.bf16.mxu0 0
    %2974 = vmatpush1.bf16.msra.mxu0 0
    %2975 = vmatprep.subr.bf16.mxu0 0
    %2976 = vmatpush1.bf16.msra.mxu0 0
    %2977 = vmatprep.subr.bf16.mxu0 0
    %2978 = vmatpush1.bf16.msra.mxu0 0
    %2979 = vmatprep.subr.bf16.mxu0 0
    %2980 = vmatpush1.bf16.msra.mxu0 0
    %2981 = vmatprep.subr.bf16.mxu0 0
    %2982 = vmatpush1.bf16.msra.mxu0 0
    %2983 = vmatprep.subr.bf16.mxu0 0
    %2984 = vmatpush1.bf16.msra.mxu0 0
    %2985 = vmatprep.subr.bf16.mxu0 0
    %2986 = vmatpush1.bf16.msra.mxu0 0
    %2987 = vmatprep.subr.bf16.mxu0 0
    %2988 = vmatpush1.bf16.msra.mxu0 0
    %2989 = vmatprep.subr.bf16.mxu0 0
    %2990 = vmatpush1.bf16.msra.mxu0 0
    %2991 = vmatprep.subr.bf16.mxu0 0
    %2992 = vmatpush1.bf16.msra.mxu0 0
    %2993 = vmatprep.subr.bf16.mxu0 0
    %2994 = vmatpush1.bf16.msra.mxu0 0
    %2995 = vmatprep.subr.bf16.mxu0 0
    %2996 = vmatpush1.bf16.msra.mxu0 0
    %2997 = vmatprep.mubr.bf16.mxu0 0
    %2998 = vmatmul.mubr.bf16.gmra.mrb[0].mxu0 %v2351
    %v2999 = vpop.f32.mrb[0].mxu0
    %v3000 = vadd.f32 %v2960, %v2999
    %v3001 = vpop.f32.mrb[0].mxu0
    %v3002 = vpop.f32.mrb[0].mxu0
    %v3003 = vpop.f32.mrb[0].mxu0
    %3004 = vdwg.mxu0
    %v3012 = vcombine.low %v2511, %v2513
    %v3013 = vcombine.high %v2511, %v2513
    %v3014 = vcombine.low %v2675, %v2677
    %v3015 = vcombine.high %v2675, %v2677
    %v3017 = vunpack.c.l.s4 1983009808
    %v3018 = vunpack.c.0.s8 %v3017
    %v3019 = vlaneseq
    %v3020 = vshrl.u32 %v3019, 7
    %v3021 = vsub.s32 %v3018, %v3020
    %v3022 = vrot.slane %v3012, %v3021
    %v3024 = vunpack.c.l.s4 1983009808
    %v3025 = vunpack.c.0.s8 %v3024
    %v3026 = vlaneseq
    %v3027 = vshrl.u32 %v3026, 7
    %v3028 = vsub.s32 %v3025, %v3027
    %v3029 = vrot.slane %v3013, %v3028
    %v3031 = vunpack.c.l.s4 1983009808
    %v3032 = vunpack.c.0.s8 %v3031
    %v3033 = vlaneseq
    %v3034 = vshrl.u32 %v3033, 7
    %v3035 = vsub.s32 %v3032, %v3034
    %v3036 = vrot.slane %v3014, %v3035
    %v3038 = vunpack.c.l.s4 1983009808
    %v3039 = vunpack.c.0.s8 %v3038
    %v3040 = vlaneseq
    %v3041 = vshrl.u32 %v3040, 7
    %v3042 = vsub.s32 %v3039, %v3041
    %v3043 = vrot.slane %v3015, %v3042
    %v3044 = vcombine.low %v3022, %v3036
    %v3045 = vcombine.high %v3022, %v3036
    %v3046 = vcombine.low %v3029, %v3043
    %v3047 = vcombine.high %v3029, %v3043
    %v3048 = vcombine.low %v2839, %v2841
    %v3049 = vcombine.high %v2839, %v2841
    %v3050 = vcombine.high %v3000, %v3000
    %v3052 = vunpack.c.l.s4 1983009808
    %v3053 = vunpack.c.0.s8 %v3052
    %v3054 = vlaneseq
    %v3055 = vshrl.u32 %v3054, 7
    %v3056 = vsub.s32 %v3053, %v3055
    %v3057 = vrot.slane %v3048, %v3056
    %v3059 = vunpack.c.l.s4 1983009808
    %v3060 = vunpack.c.0.s8 %v3059
    %v3061 = vlaneseq
    %v3062 = vshrl.u32 %v3061, 7
    %v3063 = vsub.s32 %v3060, %v3062
    %v3064 = vrot.slane %v3049, %v3063
    %v3066 = vunpack.c.l.s4 1983009808
    %v3067 = vunpack.c.0.s8 %v3066
    %v3068 = vlaneseq
    %v3069 = vshrl.u32 %v3068, 7
    %v3070 = vsub.s32 %v3067, %v3069
    %v3071 = vrot.slane %v3000, %v3070
    %v3073 = vunpack.c.l.s4 1983009808
    %v3074 = vunpack.c.0.s8 %v3073
    %v3075 = vlaneseq
    %v3076 = vshrl.u32 %v3075, 7
    %v3077 = vsub.s32 %v3074, %v3076
    %v3078 = vrot.slane %v3050, %v3077
    %v3079 = vcombine.low %v3057, %v3071
    %v3080 = vcombine.high %v3057, %v3071
    %v3081 = vcombine.low %v3064, %v3078
    %v3082 = vcombine.high %v3064, %v3078
    %3091 = vst [vmem:[#allocation8] sm:$0xff] %v3044
    %vm3092 = vcmask 1041408
    %vm3093 = vcmask 1043458
    %vm3094 = vmor %vm3093, %vm3092
    %vm3095 = vcmask 259076
    %vm3096 = vmor %vm3095, %vm3094
    %3097 = vst.msk [vmem:[#allocation8 + $0x8] sm:$0x3f] %vm3096, %v3079
    %3098 = vst [vmem:[#allocation8 + $0xe] sm:$0xff] %v3045
    %3099 = vst.msk [vmem:[#allocation8 + $0x16] sm:$0x3f] %vm3096, %v3080
    %3100 = vst [vmem:[#allocation8 + $0x1c] sm:$0xff] %v3046
    %3101 = vst.msk [vmem:[#allocation8 + $0x24] sm:$0x3f] %vm3096, %v3081
    %3102 = vst [vmem:[#allocation8 + $0x2a] sm:$0xff] %v3047
    %3103 = vst.msk [vmem:[#allocation8 + $0x32] sm:$0x3f] %vm3096, %v3082
    // Predicated region
    $region26: #{tpu_custom_call.1} parent=1 // pred_check
      _
    $region27: #{tpu_custom_call.1} parent=1 // pred_check_branch
      %3105 = sbr.rel (0) target = $region29
    $region28: #{tpu_custom_call.1} parent=1 // pred_region
      %s3107 = ssub.s32 896, 224
      %3108 = vsyncadd [#allocation4], %s3107
      %s3109 = sshll.u32 [#allocation8], 4
      %s3110 = int_to_ptr.vmem [resolvable:$true] %s3109
      %3115 = dma.vmem_to_hbm [thread:$0]  %s3110, 224, %s3, [#allocation4], 224, 224, 14
    $region29: #{tpu_custom_call.1} parent=1 // pred_fallthru
      _
    // Predicated region
    $region30: #{tpu_custom_call.1} parent=1 // pred_check
      _
    $region31: #{tpu_custom_call.1} parent=1 // pred_check_branch
      %3117 = sbr.rel (0) target = $region33
    $region32: #{tpu_custom_call.1} parent=1 // pred_region
      %3118 = dma.done [#allocation4], 896
    $region33: #{tpu_custom_call.1} parent=1 // pred_fallthru
      _
    %3119 = vsyncpa [#allocation3], 1
    %3120 = vsyncpa [#allocation6], 1
    %3121 = vsyncpa [#allocation4], 1

</llo_original>
